<compile_context>
chip_gen: v6e
topology: v6e:2x2x1
jax: 0.10.0
libtpu: 0.0.40
codegen_flags: <defaults>
</compile_context>

<pallas_src>
import math
import functools

import jax
import jax.numpy as jnp
from jax import lax
from jax.experimental import pallas as pl
from jax.experimental.pallas import tpu as pltpu


NEG_INF_BIAS = -1e9  # matches torch.full_like(..., -1e9) in the reference module


def _alibi_slopes(num_heads):
    """Per-head slope; forward and backward halves share the same slope set."""
    half = num_heads // 2
    x = 24.0 ** (1.0 / half)
    s = [1.0 / x ** (i + 1) for i in range(half)]
    return jnp.asarray(s + s, dtype=jnp.float32).reshape(num_heads, 1, 1)


def _head_signs(num_heads):
    """+1 for forward heads (attend past), -1 for backward heads (attend future)."""
    half = num_heads // 2
    return jnp.asarray([1] * half + [-1] * half,
                       dtype=jnp.int32).reshape(num_heads, 1, 1)


def _pick_tile(s, cap=512):
    for t in (512, 256, 128, 64, 32, 16, 8):
        if t <= min(s, cap) and s % t == 0:
            return t
    return s


def _pick_head_group(num_heads, head_size):
    g = min(num_heads, max(1, 256 // max(head_size, 1)))
    while num_heads % g:
        g -= 1
    return max(g, 1)


# ----------------------------- Pallas kernel --------------------------------

def flash_alibi_kernel(q_ref, k_ref, v_ref, slope_ref, sgn_ref,
                       o_ref,
                       m_acc, l_acc, o_acc,
                       *, tq, tk):
    """Flash attention with in-kernel ALiBi relative bias for a head group.

    Refs:
      q_ref:     (1, G, tq, K)   queries, pre-scaled by 1/sqrt(K)
      k_ref:     (1, G, tk, K)
      v_ref:     (1, G, tk, V)
      slope_ref: (G, 1, 1)       per-head ALiBi slope
      sgn_ref:   (G, 1, 1)       +1 forward head, -1 backward head (int32)
      o_ref:     (1, G, tq, V)   per-head attention output
    Scratch (f32): m_acc/l_acc (G, tq, 1), o_acc (G, tq, V)
    """
    qi = pl.program_id(2)
    ki = pl.program_id(3)
    nk = pl.num_programs(3)

    # ---- reset online-softmax state at the start of each kv sweep.
    @pl.when(ki == 0)
    def _():
        m_acc[...] = jnp.full_like(m_acc, -jnp.inf)
        l_acc[...] = jnp.zeros_like(l_acc)
        o_acc[...] = jnp.zeros_like(o_acc)

    q = q_ref[0]                                                    # (G, tq, K)
    k = k_ref[0]                                                    # (G, tk, K)
    v = v_ref[0]                                                    # (G, tk, V)

    # ---- scores = q @ k^T, batched over the head group (f32 accumulation).
    s = jnp.einsum('gqk,gpk->gqp', q, k,
                   preferred_element_type=jnp.float32)              # (G, tq, tk)

    # ---- ALiBi-style relative bias generated in-kernel (no HBM bias tensor).
    # sd = sgn * (row - col) is >= 0 exactly where the head may attend and then
    # equals |row - col|; masked entries get -1e9 (same constant as the module).
    row = qi * tq + lax.broadcasted_iota(jnp.int32, (1, tq, tk), 1)
    col = ki * tk + lax.broadcasted_iota(jnp.int32, (1, tq, tk), 2)
    sd = sgn_ref[...] * (row - col)                                 # (G, tq, tk)
    bias = jnp.where(sd >= 0,
                     -slope_ref[...] * sd.astype(jnp.float32),
                     jnp.float32(NEG_INF_BIAS))
    s = s + bias

    # ---- online (flash) softmax accumulation over the KV axis (f32 state).
    m_prev = m_acc[...]
    m_new = jnp.maximum(m_prev, jnp.max(s, axis=-1, keepdims=True))
    alpha = jnp.exp(m_prev - m_new)
    p = jnp.exp(s - m_new)
    l_acc[...] = alpha * l_acc[...] + jnp.sum(p, axis=-1, keepdims=True)
    o_acc[...] = alpha * o_acc[...] + jnp.einsum(
        'gqp,gpv->gqv', p.astype(v.dtype), v,
        preferred_element_type=jnp.float32)
    m_acc[...] = m_new

    # ---- epilogue: exact normalization (approx reciprocal was not accurate
    #      enough vs. the f32 reference), write per-head attention output.
    @pl.when(ki == nk - 1)
    def _():
        o_ref[0] = (o_acc[...] / l_acc[...]).astype(o_ref.dtype)


# ----------------------------- wrapper ---------------------------------------

def mha_relative(query, key, value, params, *, num_heads, key_size,
                 value_size=None, model_size=None, tile_cap=512):
    value_size = value_size or key_size
    model_size = model_size or num_heads * key_size
    if num_heads % 2 != 0:
        raise ValueError("num_heads must be even (forward/backward head split).")

    B, S, D = query.shape
    H, K, V, M = num_heads, key_size, value_size, model_size
    Dv = H * V
    assert D == H * K and value.shape[-1] == Dv

    dtype = query.dtype
    scale = 1.0 / math.sqrt(K)

    # ---- Q/K/V projections: single large lane-dense matmuls (XLA), head-major
    #      output.  The 1/sqrt(K) scale is folded into Wq/bq (trace-time, free).
    wq3 = params["wq"].reshape(D, H, K) * scale
    bq3 = params["bq"].reshape(1, H, 1, K) * scale
    qh = (jnp.einsum('bsd,dhk->bhsk', query, wq3) + bq3).astype(dtype)
    kh = (jnp.einsum('bsd,dhk->bhsk', key, params["wk"].reshape(D, H, K))
          + params["bk"].reshape(1, H, 1, K)).astype(dtype)
    vh = (jnp.einsum('bsd,dhv->bhsv', value, params["wv"].reshape(Dv, H, V))
          + params["bv"].reshape(1, H, 1, V)).astype(dtype)

    tq = _pick_tile(S, tile_cap)
    tk = _pick_tile(S, tile_cap)
    G = _pick_head_group(H, max(K, V))

    slopes = _alibi_slopes(H)                                    # (H, 1, 1) f32
    signs = _head_signs(H)                                       # (H, 1, 1) i32

    kernel = functools.partial(flash_alibi_kernel, tq=tq, tk=tk)
    grid = (B, H // G, S // tq, S // tk)

    def q_map(b, g, qi, ki): return (b, g, qi, 0)
    def kv_map(b, g, qi, ki): return (b, g, ki, 0)
    def head_map(b, g, qi, ki): return (g, 0, 0)

    grid_spec = pltpu.PrefetchScalarGridSpec(
        num_scalar_prefetch=0,
        grid=grid,
        in_specs=[
            pl.BlockSpec((1, G, tq, K), q_map),      # projected queries
            pl.BlockSpec((1, G, tk, K), kv_map),     # projected keys
            pl.BlockSpec((1, G, tk, V), kv_map),     # projected values
            pl.BlockSpec((G, 1, 1), head_map),       # ALiBi slopes
            pl.BlockSpec((G, 1, 1), head_map),       # head direction signs
        ],
        out_specs=pl.BlockSpec((1, G, tq, V), q_map),
        scratch_shapes=[
            pltpu.VMEM((G, tq, 1), jnp.float32),     # running max
            pltpu.VMEM((G, tq, 1), jnp.float32),     # running denominator
            pltpu.VMEM((G, tq, V), jnp.float32),     # weighted-V accumulator
        ],
    )

    attn = pl.pallas_call(
        kernel,
        grid_spec=grid_spec,
        out_shape=jax.ShapeDtypeStruct((B, H, S, V), dtype),
        compiler_params=pltpu.CompilerParams(
            dimension_semantics=("parallel", "parallel", "parallel", "arbitrary")),
    )(qh, kh, vh, slopes, signs)

    # ---- final projection decoupled from the flash loop: one large lane-dense
    #      matmul over all heads (equivalent to permute+reshape @ Wf + bf).
    out = jnp.einsum('bhsv,hvm->bsm', attn, params["wf"].reshape(H, V, M))
    return (out + params["bf"].reshape(1, 1, M)).astype(dtype)


# ----------------------------- pure-JAX reference ----------------------------

def _build_attn_bias(num_heads, seq_len):
    half = num_heads // 2
    x = 24.0 ** (1.0 / half)
    slopes = jnp.asarray([1.0 / x ** (i + 1) for i in range(half)],
                         jnp.float32).reshape(half, 1, 1)
    i = jnp.arange(seq_len)[:, None]
    j = jnp.arange(seq_len)[None, :]
    rel_fwd = jnp.tril(j - i).astype(jnp.float32)
    rel_bwd = jnp.triu(i - j).astype(jnp.float32)
    neg = jnp.full((half, seq_len, seq_len), NEG_INF_BIAS, jnp.float32)
    bias_fwd = slopes * rel_fwd + jnp.triu(neg, k=1)
    bias_bwd = slopes * rel_bwd + jnp.tril(neg, k=-1)
    return jnp.concatenate([bias_fwd, bias_bwd], axis=0)


def mha_relative_reference(query, key, value, params, *, num_heads, key_size,
                           value_size=None, model_size=None):
    value_size = value_size or key_size
    B, S, _ = query.shape
    H, K, V = num_heads, key_size, value_size
    q = query @ params["wq"] + params["bq"]
    k = key @ params["wk"] + params["bk"]
    v = value @ params["wv"] + params["bv"]
    qh = q.reshape(B, S, H, K).transpose(0, 2, 1, 3)
    kh = k.reshape(B, S, H, K).transpose(0, 2, 1, 3)
    vh = v.reshape(B, S, H, V).transpose(0, 2, 1, 3)
    bias = _build_attn_bias(H, S)
    scores = jnp.einsum("bhqk,bhpk->bhqp", qh, kh) / math.sqrt(K) + bias
    w = jax.nn.softmax(scores, axis=-1)
    attn = jnp.einsum("bhqp,bhpv->bhqv", w, vh)
    attn = attn.transpose(0, 2, 1, 3).reshape(B, S, H * V)
    return attn @ params["wf"] + params["bf"]


# ----------------------------- parameter init --------------------------------

def init_params(key, num_heads, key_size, value_size=None, model_size=None):
    value_size = value_size or key_size
    model_size = model_size or num_heads * key_size
    D = num_heads * key_size
    Dv = num_heads * value_size

    ks = jax.random.split(key, 8)
    # Weights stored pre-transposed as (in_features, out_features).
    return {
        "wq": jax.random.normal(ks[0], (D, D), jnp.float32) * (1.0 / math.sqrt(D)),
        "bq": jax.random.normal(ks[1], (1, D), jnp.float32) * 0.01,
        "wk": jax.random.normal(ks[2], (D, D), jnp.float32) * (1.0 / math.sqrt(D)),
        "bk": jax.random.normal(ks[3], (1, D), jnp.float32) * 0.01,
        "wv": jax.random.normal(ks[4], (Dv, Dv), jnp.float32) * (1.0 / math.sqrt(Dv)),
        "bv": jax.random.normal(ks[5], (1, Dv), jnp.float32) * 0.01,
        "wf": jax.random.normal(ks[6], (Dv, model_size), jnp.float32) * (1.0 / math.sqrt(Dv)),
        "bf": jax.random.normal(ks[7], (1, model_size), jnp.float32) * 0.01,
    }


# ----------------------------- main ------------------------------------------

if __name__ == "__main__":
    num_heads = 4
    key_size = 8
    B, S = 2, 16
    D = num_heads * key_size                     # 32

    root = jax.random.PRNGKey(0)
    k_params, k_q, k_k, k_v = jax.random.split(root, 4)

    params = init_params(k_params, num_heads, key_size)

    query = jax.random.normal(k_q, (B, S, D), jnp.float32)
    key_in = jax.random.normal(k_k, (B, S, D), jnp.float32)
    value = jax.random.normal(k_v, (B, S, D), jnp.float32)

    # tile_cap=8 so the test exercises multiple q-tiles and kv-tiles (the
    # online-softmax accumulation path), not just a single block.
    out = mha_relative(query, key_in, value, params,
                       num_heads=num_heads, key_size=key_size, tile_cap=8)
    out = jax.block_until_ready(out)

    ref = mha_relative_reference(query, key_in, value, params,
                                 num_heads=num_heads, key_size=key_size)

    assert out.shape == (B, S, num_heads * key_size)
    assert jnp.all(jnp.isfinite(out))
    assert jnp.allclose(out, ref, rtol=2e-3, atol=2e-3), \
        float(jnp.max(jnp.abs(out - ref)))
    print("KERNEL_OK")
</pallas_src>

<mosaic_0001>
module attributes {stable_mosaic.version = 11 : i64} {
  func.func @flash_alibi_kernel(%arg0: i32, %arg1: i32, %arg2: i32, %arg3: i32, %arg4: memref<1x4x8x8xf32, #tpu.memory_space<vmem>>, %arg5: memref<1x4x8x8xf32, #tpu.memory_space<vmem>>, %arg6: memref<1x4x8x8xf32, #tpu.memory_space<vmem>>, %arg7: memref<4x1x1xf32, #tpu.memory_space<vmem>>, %arg8: memref<4x1x1xi32, #tpu.memory_space<vmem>>, %arg9: memref<1x4x8x8xf32, #tpu.memory_space<vmem>>, %arg10: memref<4x8x1xf32, #tpu.memory_space<vmem>>, %arg11: memref<4x8x1xf32, #tpu.memory_space<vmem>>, %arg12: memref<4x8x8xf32, #tpu.memory_space<vmem>>) attributes {dimension_semantics = [#tpu.dimension_semantics<parallel>, #tpu.dimension_semantics<parallel>, #tpu.dimension_semantics<parallel>, #tpu.dimension_semantics<arbitrary>], iteration_bounds = array<i64: 2, 1, 2, 2>, scalar_prefetch = 0 : i64, scratch_operands = 3 : i64, tpu.core_type = #tpu.core_type<tc>, window_params = [{transform_indices = @transform_0, window_bounds = array<i64: 1, 4, 8, 8>}, {transform_indices = @transform_1, window_bounds = array<i64: 1, 4, 8, 8>}, {transform_indices = @transform_2, window_bounds = array<i64: 1, 4, 8, 8>}, {transform_indices = @transform_3, window_bounds = array<i64: 4, 1, 1>}, {transform_indices = @transform_4, window_bounds = array<i64: 4, 1, 1>}, {transform_indices = @transform_5, window_bounds = array<i64: 1, 4, 8, 8>}]} {
    %c0_i32 = arith.constant 0 : i32
    %0 = arith.cmpi eq, %arg3, %c0_i32 : i32
    %1 = arith.extui %0 : i1 to i32
    %c0_i32_0 = arith.constant 0 : i32
    %2 = arith.cmpi ne, %1, %c0_i32_0 : i32
    scf.if %2 {
      %cst_44 = arith.constant 0xFF800000 : f32
      %59 = vector.broadcast %cst_44 : f32 to vector<4x8x1xf32>
      %c0_45 = arith.constant 0 : index
      %c0_46 = arith.constant 0 : index
      %c0_47 = arith.constant 0 : index
      %60 = vector.load %arg10[%c0_45, %c0_46, %c0_47] : memref<4x8x1xf32, #tpu.memory_space<vmem>>, vector<4x8x1xf32>
      tpu.vector_store %arg10[%c0_45, %c0_46, %c0_47], %59 {strides = array<i32>} : memref<4x8x1xf32, #tpu.memory_space<vmem>>, vector<4x8x1xf32>,
      %cst_48 = arith.constant 0.000000e+00 : f32
      %61 = vector.broadcast %cst_48 : f32 to vector<4x8x1xf32>
      %c0_49 = arith.constant 0 : index
      %c0_50 = arith.constant 0 : index
      %c0_51 = arith.constant 0 : index
      %62 = vector.load %arg11[%c0_49, %c0_50, %c0_51] : memref<4x8x1xf32, #tpu.memory_space<vmem>>, vector<4x8x1xf32>
      tpu.vector_store %arg11[%c0_49, %c0_50, %c0_51], %61 {strides = array<i32>} : memref<4x8x1xf32, #tpu.memory_space<vmem>>, vector<4x8x1xf32>,
      %cst_52 = arith.constant 0.000000e+00 : f32
      %63 = vector.broadcast %cst_52 : f32 to vector<4x8x8xf32>
      %c0_53 = arith.constant 0 : index
      %c0_54 = arith.constant 0 : index
      %c0_55 = arith.constant 0 : index
      %64 = vector.load %arg12[%c0_53, %c0_54, %c0_55] : memref<4x8x8xf32, #tpu.memory_space<vmem>>, vector<4x8x8xf32>
      tpu.vector_store %arg12[%c0_53, %c0_54, %c0_55], %63 {strides = array<i32>} : memref<4x8x8xf32, #tpu.memory_space<vmem>>, vector<4x8x8xf32>,
    } else {
    }
    %c0 = arith.constant 0 : index
    %c0_1 = arith.constant 0 : index
    %c0_2 = arith.constant 0 : index
    %c0_3 = arith.constant 0 : index
    %3 = vector.load %arg4[%c0, %c0_1, %c0_2, %c0_3] : memref<1x4x8x8xf32, #tpu.memory_space<vmem>>, vector<1x4x8x8xf32>
    %4 = vector.shape_cast %3 : vector<1x4x8x8xf32> to vector<4x8x8xf32>
    %c0_4 = arith.constant 0 : index
    %c0_5 = arith.constant 0 : index
    %c0_6 = arith.constant 0 : index
    %c0_7 = arith.constant 0 : index
    %5 = vector.load %arg5[%c0_4, %c0_5, %c0_6, %c0_7] : memref<1x4x8x8xf32, #tpu.memory_space<vmem>>, vector<1x4x8x8xf32>
    %6 = vector.shape_cast %5 : vector<1x4x8x8xf32> to vector<4x8x8xf32>
    %c0_8 = arith.constant 0 : index
    %c0_9 = arith.constant 0 : index
    %c0_10 = arith.constant 0 : index
    %c0_11 = arith.constant 0 : index
    %7 = vector.load %arg6[%c0_8, %c0_9, %c0_10, %c0_11] : memref<1x4x8x8xf32, #tpu.memory_space<vmem>>, vector<1x4x8x8xf32>
    %8 = vector.shape_cast %7 : vector<1x4x8x8xf32> to vector<4x8x8xf32>
    "tpu.trace_start"() <{level = 10 : i32, message = "gqk,gpk->gqp"}> : () -> ()
    %cst = arith.constant dense<0.000000e+00> : vector<4x8x8xf32>
    %9 = tpu.matmul %4, %6, %cst {dimension_numbers = #tpu.dot_dimension_numbers<[2], [2], [1], [1], [0, 0, 0, 1, 1, 1], [0], [0]>} : vector<4x8x8xf32>, vector<4x8x8xf32>, vector<4x8x8xf32> -> vector<4x8x8xf32>
    "tpu.trace_stop"() : () -> ()
    %c8_i32 = arith.constant 8 : i32
    %10 = arith.muli %arg2, %c8_i32 : i32
    %11 = tpu.iota {dimensions = array<i32: 1>} : vector<1x8x8xi32>
    %12 = vector.broadcast %10 : i32 to vector<1x8x8xi32>
    %13 = arith.addi %12, %11 : vector<1x8x8xi32>
    %c8_i32_12 = arith.constant 8 : i32
    %14 = arith.muli %arg3, %c8_i32_12 : i32
    %15 = tpu.iota {dimensions = array<i32: 2>} : vector<1x8x8xi32>
    %16 = vector.broadcast %14 : i32 to vector<1x8x8xi32>
    %17 = arith.addi %16, %15 : vector<1x8x8xi32>
    %c0_13 = arith.constant 0 : index
    %c0_14 = arith.constant 0 : index
    %c0_15 = arith.constant 0 : index
    %18 = vector.load %arg8[%c0_13, %c0_14, %c0_15] : memref<4x1x1xi32, #tpu.memory_space<vmem>>, vector<4x1x1xi32>
    %19 = arith.subi %13, %17 : vector<1x8x8xi32>
    %20 = vector.broadcast %18 : vector<4x1x1xi32> to vector<4x8x8xi32>
    %21 = vector.broadcast %19 : vector<1x8x8xi32> to vector<4x8x8xi32>
    %22 = arith.muli %20, %21 : vector<4x8x8xi32>
    %c0_i32_16 = arith.constant 0 : i32
    %23 = vector.broadcast %c0_i32_16 : i32 to vector<4x8x8xi32>
    %24 = arith.cmpi sge, %22, %23 : vector<4x8x8xi32>
    %c0_17 = arith.constant 0 : index
    %c0_18 = arith.constant 0 : index
    %c0_19 = arith.constant 0 : index
    %25 = vector.load %arg7[%c0_17, %c0_18, %c0_19] : memref<4x1x1xf32, #tpu.memory_space<vmem>>, vector<4x1x1xf32>
    %cst_20 = arith.constant 0.000000e+00 : f32
    %26 = vector.broadcast %cst_20 : f32 to vector<4x1x1xf32>
    %27 = arith.subf %26, %25 : vector<4x1x1xf32>
    %28 = arith.sitofp %22 : vector<4x8x8xi32> to vector<4x8x8xf32>
    %29 = vector.broadcast %27 : vector<4x1x1xf32> to vector<4x8x8xf32>
    %30 = arith.mulf %29, %28 : vector<4x8x8xf32>
    %cst_21 = arith.constant -1.000000e+09 : f32
    %31 = vector.broadcast %cst_21 : f32 to vector<4x8x8xf32>
    %32 = arith.select %24, %30, %31 : vector<4x8x8xi1>, vector<4x8x8xf32>
    %33 = arith.addf %9, %32 : vector<4x8x8xf32>
    %c0_22 = arith.constant 0 : index
    %c0_23 = arith.constant 0 : index
    %c0_24 = arith.constant 0 : index
    %34 = vector.load %arg10[%c0_22, %c0_23, %c0_24] : memref<4x8x1xf32, #tpu.memory_space<vmem>>, vector<4x8x1xf32>
    %cst_25 = arith.constant dense<0xFF800000> : vector<4x8xf32>
    %35 = vector.multi_reduction <maximumf>, %33, %cst_25 [2] : vector<4x8x8xf32> to vector<4x8xf32>
    %36 = vector.shape_cast %35 : vector<4x8xf32> to vector<4x8x1xf32>
    %37 = arith.maximumf %34, %36 : vector<4x8x1xf32>
    %38 = arith.subf %34, %37 : vector<4x8x1xf32>
    %39 = math.exp %38 : vector<4x8x1xf32>
    %40 = vector.broadcast %37 : vector<4x8x1xf32> to vector<4x8x8xf32>
    %41 = arith.subf %33, %40 : vector<4x8x8xf32>
    %42 = math.exp %41 : vector<4x8x8xf32>
    %c0_26 = arith.constant 0 : index
    %c0_27 = arith.constant 0 : index
    %c0_28 = arith.constant 0 : index
    %43 = vector.load %arg11[%c0_26, %c0_27, %c0_28] : memref<4x8x1xf32, #tpu.memory_space<vmem>>, vector<4x8x1xf32>
    %44 = arith.mulf %39, %43 : vector<4x8x1xf32>
    %cst_29 = arith.constant dense<0.000000e+00> : vector<4x8xf32>
    %45 = vector.multi_reduction <add>, %42, %cst_29 [2] : vector<4x8x8xf32> to vector<4x8xf32>
    %46 = vector.shape_cast %45 : vector<4x8xf32> to vector<4x8x1xf32>
    %47 = arith.addf %44, %46 : vector<4x8x1xf32>
    %c0_30 = arith.constant 0 : index
    %c0_31 = arith.constant 0 : index
    %c0_32 = arith.constant 0 : index
    %48 = vector.load %arg11[%c0_30, %c0_31, %c0_32] : memref<4x8x1xf32, #tpu.memory_space<vmem>>, vector<4x8x1xf32>
    tpu.vector_store %arg11[%c0_30, %c0_31, %c0_32], %47 {strides = array<i32>} : memref<4x8x1xf32, #tpu.memory_space<vmem>>, vector<4x8x1xf32>,
    %c0_33 = arith.constant 0 : index
    %c0_34 = arith.constant 0 : index
    %c0_35 = arith.constant 0 : index
    %49 = vector.load %arg12[%c0_33, %c0_34, %c0_35] : memref<4x8x8xf32, #tpu.memory_space<vmem>>, vector<4x8x8xf32>
    %50 = vector.broadcast %39 : vector<4x8x1xf32> to vector<4x8x8xf32>
    %51 = arith.mulf %50, %49 : vector<4x8x8xf32>
    "tpu.trace_start"() <{level = 10 : i32, message = "gqp,gpv->gqv"}> : () -> ()
    %cst_36 = arith.constant dense<0.000000e+00> : vector<4x8x8xf32>
    %52 = tpu.matmul %42, %8, %cst_36 {dimension_numbers = #tpu.dot_dimension_numbers<[2], [1], [1], [2], [0, 0, 0, 1, 1, 2], [0], [0]>} : vector<4x8x8xf32>, vector<4x8x8xf32>, vector<4x8x8xf32> -> vector<4x8x8xf32>
    "tpu.trace_stop"() : () -> ()
    %53 = arith.addf %51, %52 : vector<4x8x8xf32>
    %c0_37 = arith.constant 0 : index
    %c0_38 = arith.constant 0 : index
    %c0_39 = arith.constant 0 : index
    %54 = vector.load %arg12[%c0_37, %c0_38, %c0_39] : memref<4x8x8xf32, #tpu.memory_space<vmem>>, vector<4x8x8xf32>
    tpu.vector_store %arg12[%c0_37, %c0_38, %c0_39], %53 {strides = array<i32>} : memref<4x8x8xf32, #tpu.memory_space<vmem>>, vector<4x8x8xf32>,
    %c0_40 = arith.constant 0 : index
    %c0_41 = arith.constant 0 : index
    %c0_42 = arith.constant 0 : index
    %55 = vector.load %arg10[%c0_40, %c0_41, %c0_42] : memref<4x8x1xf32, #tpu.memory_space<vmem>>, vector<4x8x1xf32>
    tpu.vector_store %arg10[%c0_40, %c0_41, %c0_42], %37 {strides = array<i32>} : memref<4x8x1xf32, #tpu.memory_space<vmem>>, vector<4x8x1xf32>,
    %c1_i32 = arith.constant 1 : i32
    %56 = arith.cmpi eq, %arg3, %c1_i32 : i32
    %57 = arith.extui %56 : i1 to i32
    %c0_i32_43 = arith.constant 0 : i32
    %58 = arith.cmpi ne, %57, %c0_i32_43 : i32
    scf.if %58 {
      %c0_44 = arith.constant 0 : index
      %c0_45 = arith.constant 0 : index
      %c0_46 = arith.constant 0 : index
      %59 = vector.load %arg12[%c0_44, %c0_45, %c0_46] : memref<4x8x8xf32, #tpu.memory_space<vmem>>, vector<4x8x8xf32>
      %c0_47 = arith.constant 0 : index
      %c0_48 = arith.constant 0 : index
      %c0_49 = arith.constant 0 : index
      %60 = vector.load %arg11[%c0_47, %c0_48, %c0_49] : memref<4x8x1xf32, #tpu.memory_space<vmem>>, vector<4x8x1xf32>
      %61 = vector.broadcast %60 : vector<4x8x1xf32> to vector<4x8x8xf32>
      %62 = arith.divf %59, %61 : vector<4x8x8xf32>
      %c0_50 = arith.constant 0 : index
      %c0_51 = arith.constant 0 : index
      %c0_52 = arith.constant 0 : index
      %c0_53 = arith.constant 0 : index
      %63 = vector.load %arg9[%c0_50, %c0_51, %c0_52, %c0_53] : memref<1x4x8x8xf32, #tpu.memory_space<vmem>>, vector<1x4x8x8xf32>
      %64 = vector.shape_cast %63 : vector<1x4x8x8xf32> to vector<4x8x8xf32>
      %65 = vector.shape_cast %62 : vector<4x8x8xf32> to vector<1x4x8x8xf32>
      tpu.vector_store %arg9[%c0_50, %c0_51, %c0_52, %c0_53], %65 {strides = array<i32>} : memref<1x4x8x8xf32, #tpu.memory_space<vmem>>, vector<1x4x8x8xf32>,
    } else {
    }
    return
  }
  func.func @transform_0(%arg0: i32, %arg1: i32, %arg2: i32, %arg3: i32) -> (i32, i32, i32, i32) {
    %c0_i32 = arith.constant 0 : i32
    %c0_i32_0 = arith.constant 0 : i32
    return %arg0, %arg1, %arg2, %c0_i32 : i32, i32, i32, i32
  }
  func.func @transform_1(%arg0: i32, %arg1: i32, %arg2: i32, %arg3: i32) -> (i32, i32, i32, i32) {
    %c0_i32 = arith.constant 0 : i32
    %c0_i32_0 = arith.constant 0 : i32
    return %arg0, %arg1, %arg3, %c0_i32 : i32, i32, i32, i32
  }
  func.func @transform_2(%arg0: i32, %arg1: i32, %arg2: i32, %arg3: i32) -> (i32, i32, i32, i32) {
    %c0_i32 = arith.constant 0 : i32
    %c0_i32_0 = arith.constant 0 : i32
    return %arg0, %arg1, %arg3, %c0_i32 : i32, i32, i32, i32
  }
  func.func @transform_3(%arg0: i32, %arg1: i32, %arg2: i32, %arg3: i32) -> (i32, i32, i32) {
    %c0_i32 = arith.constant 0 : i32
    %c0_i32_0 = arith.constant 0 : i32
    %c0_i32_1 = arith.constant 0 : i32
    return %arg1, %c0_i32, %c0_i32_0 : i32, i32, i32
  }
  func.func @transform_4(%arg0: i32, %arg1: i32, %arg2: i32, %arg3: i32) -> (i32, i32, i32) {
    %c0_i32 = arith.constant 0 : i32
    %c0_i32_0 = arith.constant 0 : i32
    %c0_i32_1 = arith.constant 0 : i32
    return %arg1, %c0_i32, %c0_i32_0 : i32, i32, i32
  }
  func.func @transform_5(%arg0: i32, %arg1: i32, %arg2: i32, %arg3: i32) -> (i32, i32, i32, i32) {
    %c0_i32 = arith.constant 0 : i32
    %c0_i32_0 = arith.constant 0 : i32
    return %arg0, %arg1, %arg2, %c0_i32 : i32, i32, i32, i32
  }
}

</mosaic_0001>

<llo_original>
// kernel: tpu_custom_call.1
$region0: #{tpu_custom_call.1}
  #allocation0 [shape = 'u32[]', space=smem, size = 0x4, offset = 0x4, fixed_abs, tag = 'smem constant byte address 0x4 - core index']
  #allocation1 [shape = 'u32[144,128]{1,0:T(1,128)}', space=vmem, size = 0x12000, scoped, tag = 'internal scratch']
  #allocation2 [shape = 'f32[4,8,1]{2,1,0:T(8,128)}', space=vmem, size = 0x4000, scoped, tag = 'scratch operand']
  #allocation3 [shape = 'f32[4,8,1]{2,1,0:T(8,128)}', space=vmem, size = 0x4000, scoped, tag = 'scratch operand']
  #allocation4 [shape = 'f32[4,8,8]{2,1,0:T(8,128)}', space=vmem, size = 0x4000, scoped, tag = 'scratch operand']
  %s0 = inlined_call_operand.vmem [shape: f32[2,4,16,8], index: 0, kind: input, shape index: {}]
  %s1 = inlined_call_operand.vmem [shape: f32[2,4,16,8], index: 1, kind: input, shape index: {}]
  %s2 = inlined_call_operand.vmem [shape: f32[2,4,16,8], index: 2, kind: input, shape index: {}]
  %s3 = inlined_call_operand.vmem [shape: f32[4,1,1], index: 3, kind: input, shape index: {}]
  %s4 = inlined_call_operand.vmem [shape: s32[4,1,1], index: 4, kind: input, shape index: {}]
  %s5 = inlined_call_operand.vmem [shape: f32[2,4,16,8], index: 5, kind: output, shape index: {}]
  %s6 = sld [smem:[#allocation0]]
  $region209: #{tpu_custom_call.1} parent=0
    _
  %s8 = ssub.s32 1, %s6
  %s9 = scalar_select 0, %s8, %s6
  $region1: #{tpu_custom_call.1} parent=0
    #allocation5 [shape = 'u8[32768]{0}', space=vmem, size = 0x8000, scoped, tag = 'input window, operand 0']
    #allocation6 [shape = 'u8[32768]{0}', space=vmem, size = 0x8000, scoped, tag = 'input window, operand 1']
    #allocation7 [shape = 'u8[32768]{0}', space=vmem, size = 0x8000, scoped, tag = 'input window, operand 2']
    #allocation8 [shape = 'u8[32768]{0}', space=vmem, size = 0x8000, scoped, tag = 'output window, operand 0']
    loop: start=0, step=1, limit=10
    $region2: #{tpu_custom_call.1} parent=1 // loop_pre_header
      _
    $region3: #{tpu_custom_call.1} parent=1 // loop_header
      %s11 = sphi 0, %s15
      %p12 = scmp.ge.s32.totalorder %s11, 10
      %s18 = sphi 0, %s44
      %s19 = sphi 0, %s40
      %s20 = sphi 0, %s36
      %s21 = sphi 0, %s32
      %s22 = sphi 0, %s18
      %s23 = sphi 0, %s19
      %s24 = sphi 0, %s20
      %s25 = sphi 0, %s21
      %s26 = sphi 0, %s22
      %s27 = sphi 0, %s23
      %s28 = sphi 0, %s24
      %s29 = sphi 0, %s25
      %s51 = sphi 0, %s53
      %s54 = sphi 0, %s51
      %s55 = sphi 0, %s54
      %s71 = sphi 0, %s55
      %s81 = sphi 0, %s83
      %s84 = sphi 0, %s81
      %s85 = sphi 0, %s84
      %s101 = sphi 0, %s85
      %s111 = sphi 0, %s113
      %s114 = sphi 0, %s111
      %s115 = sphi 0, %s114
      %s131 = sphi 0, %s115
      %s137 = sphi 0, %s139
      %s140 = sphi 0, %s137
      %s141 = sphi 0, %s140
      %s157 = sphi 0, %s141
      %s163 = sphi 0, %s165
      %s166 = sphi 0, %s163
      %s167 = sphi 0, %s166
      %s183 = sphi 0, %s167
      %s193 = sphi 0, %s195
      %s196 = sphi 0, %s193
      %s197 = sphi 0, %s196
      %s213 = sphi 0, %s197
    $region4: #{tpu_custom_call.1} parent=1 // loop_header_branch
      %14 = sbr.rel (%p12) target = $region8
    $region5: #{tpu_custom_call.1} parent=1 // loop_body
      %s16 = ssub.s32 %s11, 1
      %s17 = ssub.s32 %s11, 2
      %s30 = sadd.s32 1, %s21
      %p31 = scmp.ge.s32.totalorder %s30, 2
      %s32 = scalar_select %p31, 0, %s30
      %s33 = sadd.s32 1, %s20
      %s34 = scalar_select %p31, %s33, %s20
      %p35 = scmp.ge.s32.totalorder %s34, 2
      %s36 = scalar_select %p35, 0, %s34
      %s37 = sadd.s32 1, %s19
      %s38 = scalar_select %p35, %s37, %s19
      %p39 = scmp.ge.s32.totalorder %s38, 1
      %s40 = scalar_select %p39, 0, %s38
      %s41 = sadd.s32 1, %s18
      %s42 = scalar_select %p39, %s41, %s18
      %p43 = scmp.ge.s32.totalorder %s42, 2
      %s44 = scalar_select %p43, 0, %s42
      %s45 = ssub.s32 %s18, %s44
      %s46 = ssub.s32 %s19, %s40
      %s47 = sor.u32 %s45, %s46
      %s48 = ssub.s32 %s20, %s36
      %s49 = sor.u32 %s47, %s48
      %p50 = scmp.eq.s32.totalorder %s49, 0
      %s52 = sadd.s32 %s51, 1
      %s53 = scalar_select %p50, %s51, %s52
      %p56 = pneg %p50
      %p57 = scmp.eq.s32.totalorder %s11, 7
      %p58 = por %p56, %p57
      %p59 = scmp.ne.s32.totalorder %s51, %s54
      %p60 = scmp.eq.s32.totalorder %s11, 0
      %p61 = por %p59, %p60
      %p62 = scmp.ne.s32.totalorder %s51, %s54
      %p63 = scmp.eq.s32.totalorder %s16, 7
      %p64 = por %p62, %p63
      %p65 = scmp.ne.s32.totalorder %s54, %s55
      %p66 = scmp.eq.s32.totalorder %s16, 0
      %p67 = por %p65, %p66
      %p68 = scmp.ne.s32.totalorder %s54, %s55
      %p69 = scmp.eq.s32.totalorder %s17, 7
      %p70 = por %p68, %p69
      %p72 = scmp.ne.s32.totalorder %s55, %s71
      %p73 = scmp.eq.s32.totalorder %s17, 0
      %p74 = por %p72, %p73
      %s75 = ssub.s32 %s18, %s44
      %s76 = ssub.s32 %s19, %s40
      %s77 = sor.u32 %s75, %s76
      %s78 = ssub.s32 %s21, %s32
      %s79 = sor.u32 %s77, %s78
      %p80 = scmp.eq.s32.totalorder %s79, 0
      %s82 = sadd.s32 %s81, 1
      %s83 = scalar_select %p80, %s81, %s82
      %p86 = pneg %p80
      %p87 = scmp.eq.s32.totalorder %s11, 7
      %p88 = por %p86, %p87
      %p89 = scmp.ne.s32.totalorder %s81, %s84
      %p90 = scmp.eq.s32.totalorder %s11, 0
      %p91 = por %p89, %p90
      %p92 = scmp.ne.s32.totalorder %s81, %s84
      %p93 = scmp.eq.s32.totalorder %s16, 7
      %p94 = por %p92, %p93
      %p95 = scmp.ne.s32.totalorder %s84, %s85
      %p96 = scmp.eq.s32.totalorder %s16, 0
      %p97 = por %p95, %p96
      %p98 = scmp.ne.s32.totalorder %s84, %s85
      %p99 = scmp.eq.s32.totalorder %s17, 7
      %p100 = por %p98, %p99
      %p102 = scmp.ne.s32.totalorder %s85, %s101
      %p103 = scmp.eq.s32.totalorder %s17, 0
      %p104 = por %p102, %p103
      %s105 = ssub.s32 %s18, %s44
      %s106 = ssub.s32 %s19, %s40
      %s107 = sor.u32 %s105, %s106
      %s108 = ssub.s32 %s21, %s32
      %s109 = sor.u32 %s107, %s108
      %p110 = scmp.eq.s32.totalorder %s109, 0
      %s112 = sadd.s32 %s111, 1
      %s113 = scalar_select %p110, %s111, %s112
      %p116 = pneg %p110
      %p117 = scmp.eq.s32.totalorder %s11, 7
      %p118 = por %p116, %p117
      %p119 = scmp.ne.s32.totalorder %s111, %s114
      %p120 = scmp.eq.s32.totalorder %s11, 0
      %p121 = por %p119, %p120
      %p122 = scmp.ne.s32.totalorder %s111, %s114
      %p123 = scmp.eq.s32.totalorder %s16, 7
      %p124 = por %p122, %p123
      %p125 = scmp.ne.s32.totalorder %s114, %s115
      %p126 = scmp.eq.s32.totalorder %s16, 0
      %p127 = por %p125, %p126
      %p128 = scmp.ne.s32.totalorder %s114, %s115
      %p129 = scmp.eq.s32.totalorder %s17, 7
      %p130 = por %p128, %p129
      %p132 = scmp.ne.s32.totalorder %s115, %s131
      %p133 = scmp.eq.s32.totalorder %s17, 0
      %p134 = por %p132, %p133
      %s135 = ssub.s32 %s19, %s40
      %p136 = scmp.eq.s32.totalorder %s135, 0
      %s138 = sadd.s32 %s137, 1
      %s139 = scalar_select %p136, %s137, %s138
      %p142 = pneg %p136
      %p143 = scmp.eq.s32.totalorder %s11, 7
      %p144 = por %p142, %p143
      %p145 = scmp.ne.s32.totalorder %s137, %s140
      %p146 = scmp.eq.s32.totalorder %s11, 0
      %p147 = por %p145, %p146
      %p148 = scmp.ne.s32.totalorder %s137, %s140
      %p149 = scmp.eq.s32.totalorder %s16, 7
      %p150 = por %p148, %p149
      %p151 = scmp.ne.s32.totalorder %s140, %s141
      %p152 = scmp.eq.s32.totalorder %s16, 0
      %p153 = por %p151, %p152
      %p154 = scmp.ne.s32.totalorder %s140, %s141
      %p155 = scmp.eq.s32.totalorder %s17, 7
      %p156 = por %p154, %p155
      %p158 = scmp.ne.s32.totalorder %s141, %s157
      %p159 = scmp.eq.s32.totalorder %s17, 0
      %p160 = por %p158, %p159
      %s161 = ssub.s32 %s19, %s40
      %p162 = scmp.eq.s32.totalorder %s161, 0
      %s164 = sadd.s32 %s163, 1
      %s165 = scalar_select %p162, %s163, %s164
      %p168 = pneg %p162
      %p169 = scmp.eq.s32.totalorder %s11, 7
      %p170 = por %p168, %p169
      %p171 = scmp.ne.s32.totalorder %s163, %s166
      %p172 = scmp.eq.s32.totalorder %s11, 0
      %p173 = por %p171, %p172
      %p174 = scmp.ne.s32.totalorder %s163, %s166
      %p175 = scmp.eq.s32.totalorder %s16, 7
      %p176 = por %p174, %p175
      %p177 = scmp.ne.s32.totalorder %s166, %s167
      %p178 = scmp.eq.s32.totalorder %s16, 0
      %p179 = por %p177, %p178
      %p180 = scmp.ne.s32.totalorder %s166, %s167
      %p181 = scmp.eq.s32.totalorder %s17, 7
      %p182 = por %p180, %p181
      %p184 = scmp.ne.s32.totalorder %s167, %s183
      %p185 = scmp.eq.s32.totalorder %s17, 0
      %p186 = por %p184, %p185
      %s187 = ssub.s32 %s18, %s44
      %s188 = ssub.s32 %s19, %s40
      %s189 = sor.u32 %s187, %s188
      %s190 = ssub.s32 %s20, %s36
      %s191 = sor.u32 %s189, %s190
      %p192 = scmp.eq.s32.totalorder %s191, 0
      %s194 = sadd.s32 %s193, 1
      %s195 = scalar_select %p192, %s193, %s194
      %p198 = pneg %p192
      %p199 = scmp.eq.s32.totalorder %s11, 7
      %p200 = por %p198, %p199
      %p201 = scmp.ne.s32.totalorder %s193, %s196
      %p202 = scmp.eq.s32.totalorder %s11, 0
      %p203 = por %p201, %p202
      %p204 = scmp.ne.s32.totalorder %s193, %s196
      %p205 = scmp.eq.s32.totalorder %s16, 7
      %p206 = por %p204, %p205
      %p207 = scmp.ne.s32.totalorder %s196, %s197
      %p208 = scmp.eq.s32.totalorder %s16, 0
      %p209 = por %p207, %p208
      %p210 = scmp.ne.s32.totalorder %s196, %s197
      %p211 = scmp.eq.s32.totalorder %s17, 7
      %p212 = por %p210, %p211
      %p214 = scmp.ne.s32.totalorder %s197, %s213
      %p215 = scmp.eq.s32.totalorder %s17, 0
      %p216 = por %p214, %p215
      %p217 = scmp.le.s32.totalorder 1, %s11
      %p218 = scmp.lt.s32.totalorder %s11, 9
      %p219 = pnand %p217, %p218
      %p220 = pneg %p219
      // Predicated region
      $region9: #{tpu_custom_call.1} parent=5 // pred_check
        _
      $region10: #{tpu_custom_call.1} parent=5 // pred_check_branch
        %222 = sbr.rel (%p219) target = $region12
      $region11: #{tpu_custom_call.1} parent=5 // pred_region
        %s223 = ssub.s32 %s11, 1
        // Predicated region
        $region13: #{tpu_custom_call.1} parent=11 // pred_check
          %p224 = pneg %p153
        $region14: #{tpu_custom_call.1} parent=11 // pred_check_branch
          %226 = sbr.rel (%p224) target = $region16
        $region15: #{tpu_custom_call.1} parent=11 // pred_region
          %s227 = smul.u32 4, %s23
          %p228 = scmp.lt.s32.totalorder %s227, 3
          %s229 = scalar_select %p228, %s227, 3
          %s230 = scalar_lea.vmem %s3, %s229
          %s231 = smul.u32 4, %s23
        $region16: #{tpu_custom_call.1} parent=11 // pred_fallthru
          _
        // Predicated region
        $region17: #{tpu_custom_call.1} parent=11 // pred_check
          %p232 = pneg %p179
        $region18: #{tpu_custom_call.1} parent=11 // pred_check_branch
          %234 = sbr.rel (%p232) target = $region20
        $region19: #{tpu_custom_call.1} parent=11 // pred_region
          %s235 = smul.u32 4, %s23
          %p236 = scmp.lt.s32.totalorder %s235, 3
          %s237 = scalar_select %p236, %s235, 3
          %s238 = scalar_lea.vmem %s4, %s237
          %s239 = smul.u32 4, %s23
        $region20: #{tpu_custom_call.1} parent=11 // pred_fallthru
          _
      $region12: #{tpu_custom_call.1} parent=5 // pred_fallthru
        _
      %p240 = scmp.lt.s32.totalorder %s11, 8
      // Predicated region
      $region21: #{tpu_custom_call.1} parent=5 // pred_check
        %p241 = pneg %p240
      $region22: #{tpu_custom_call.1} parent=5 // pred_check_branch
        %243 = sbr.rel (%p241) target = $region24
      $region23: #{tpu_custom_call.1} parent=5 // pred_region
        // Predicated region
        $region25: #{tpu_custom_call.1} parent=23 // pred_check
          %p244 = pneg %p61
        $region26: #{tpu_custom_call.1} parent=23 // pred_check_branch
          %246 = sbr.rel (%p244) target = $region28
        $region27: #{tpu_custom_call.1} parent=23 // pred_region
          %s247 = sand.u32 %s51, 1
          %s248 = sand.u32 %s51, 1
          %s249 = smul.addr %s248, 32
          %s250 = scalar_lea.vmem [#allocation5], %s249
          %s251 = smul.u32 4, %s19
          %s252 = smul.addr %s251, 2
          %s253 = sadd.s32 %s20, %s252
          %s254 = smul.addr %s18, 8
          %s255 = sadd.s32 %s253, %s254
          %s256 = smul.addr %s255, 8
          %s257 = scalar_lea.vmem %s0, %s256
          // Predicated region
          $region29: #{tpu_custom_call.1} parent=27 // pred_check
            _
          $region30: #{tpu_custom_call.1} parent=27 // pred_check_branch
            %259 = sbr.rel (0) target = $region32
          $region31: #{tpu_custom_call.1} parent=27 // pred_region
            // Predicated region
            $region33: #{tpu_custom_call.1} parent=31 // pred_check
              _
            $region34: #{tpu_custom_call.1} parent=31 // pred_check_branch
              %261 = sbr.rel (0) target = $region36
            $region35: #{tpu_custom_call.1} parent=31 // pred_region
              // Predicated region
              $region48: #{tpu_custom_call.1} parent=35 // pred_check
                _
              $region49: #{tpu_custom_call.1} parent=35 // pred_check_branch
                %283 = sbr.rel (0) target = $region51
              $region50: #{tpu_custom_call.1} parent=35 // pred_region
                loop: start=0, step=1, limit=1
                $region52: #{tpu_custom_call.1} parent=50 // loop_pre_header
                  _
                $region53: #{tpu_custom_call.1} parent=50 // loop_header
                  %s285 = sphi 0, %s289
                  %p286 = scmp.ge.s32.totalorder %s285, 1
                  %s290 = sphi %s257, %s257
                  %s291 = sphi %s250, %s250
                $region54: #{tpu_custom_call.1} parent=50 // loop_header_branch
                  %288 = sbr.rel (%p286) target = $region58
                $region55: #{tpu_custom_call.1} parent=50 // loop_body
                  %v292 = vld [vmem:[%s290] sm:$0xff]
                  %293 = vst [vmem:[%s291] sm:$0xff] %v292
                  %v294 = vld [vmem:[%s290 + $0x10] sm:$0xff]
                  %295 = vst [vmem:[%s291 + $0x8] sm:$0xff] %v294
                  %v296 = vld [vmem:[%s290 + $0x20] sm:$0xff]
                  %297 = vst [vmem:[%s291 + $0x10] sm:$0xff] %v296
                  %v298 = vld [vmem:[%s290 + $0x30] sm:$0xff]
                  %299 = vst [vmem:[%s291 + $0x18] sm:$0xff] %v298
                $region56: #{tpu_custom_call.1} parent=50 // loop_footer
                  %s289 = sadd.s32 1, %s285
                $region57: #{tpu_custom_call.1} parent=50 // loop_footer_branch
                  %284 = sbr.rel target = $region53
                $region58: #{tpu_custom_call.1} parent=50 // loop_exit
                  _
              $region51: #{tpu_custom_call.1} parent=35 // pred_fallthru
                _
              // Predicated region
              $region59: #{tpu_custom_call.1} parent=35 // pred_check
                _
              $region60: #{tpu_custom_call.1} parent=35 // pred_check_branch
                %301 = sbr.rel target = $region62
              $region61: #{tpu_custom_call.1} parent=35 // pred_region
                _
              $region62: #{tpu_custom_call.1} parent=35 // pred_fallthru
                _
            $region36: #{tpu_custom_call.1} parent=31 // pred_fallthru
              _
            // Predicated region
            $region37: #{tpu_custom_call.1} parent=31 // pred_check
              _
            $region38: #{tpu_custom_call.1} parent=31 // pred_check_branch
              %263 = sbr.rel target = $region40
            $region39: #{tpu_custom_call.1} parent=31 // pred_region
              %s265 = ssub.s32 256, 1
              loop: start=0, step=1, limit=1
              $region41: #{tpu_custom_call.1} parent=39 // loop_pre_header
                _
              $region42: #{tpu_custom_call.1} parent=39 // loop_header
                %s267 = sphi 0, %s271
                %p268 = scmp.ge.s32.totalorder %s267, 1
                %s272 = sphi %s257, %s257
                %s273 = sphi %s250, %s250
              $region43: #{tpu_custom_call.1} parent=39 // loop_header_branch
                %270 = sbr.rel (%p268) target = $region47
              $region44: #{tpu_custom_call.1} parent=39 // loop_body
                %v274 = vld [vmem:[%s272] sm:%s265]
                %275 = vst [vmem:[%s273] sm:%s265] %v274
                %v276 = vld [vmem:[%s272 + $0x10] sm:%s265]
                %277 = vst [vmem:[%s273 + $0x8] sm:%s265] %v276
                %v278 = vld [vmem:[%s272 + $0x20] sm:%s265]
                %279 = vst [vmem:[%s273 + $0x10] sm:%s265] %v278
                %v280 = vld [vmem:[%s272 + $0x30] sm:%s265]
                %281 = vst [vmem:[%s273 + $0x18] sm:%s265] %v280
              $region45: #{tpu_custom_call.1} parent=39 // loop_footer
                %s271 = sadd.s32 1, %s267
              $region46: #{tpu_custom_call.1} parent=39 // loop_footer_branch
                %266 = sbr.rel target = $region42
              $region47: #{tpu_custom_call.1} parent=39 // loop_exit
                _
            $region40: #{tpu_custom_call.1} parent=31 // pred_fallthru
              _
          $region32: #{tpu_custom_call.1} parent=27 // pred_fallthru
            _
          %302 = vnop
        $region28: #{tpu_custom_call.1} parent=23 // pred_fallthru
          _
        // Predicated region
        $region63: #{tpu_custom_call.1} parent=23 // pred_check
          %p303 = pneg %p91
        $region64: #{tpu_custom_call.1} parent=23 // pred_check_branch
          %305 = sbr.rel (%p303) target = $region66
        $region65: #{tpu_custom_call.1} parent=23 // pred_region
          %s306 = sand.u32 %s81, 1
          %s307 = sand.u32 %s81, 1
          %s308 = smul.addr %s307, 32
          %s309 = scalar_lea.vmem [#allocation6], %s308
          %s310 = smul.u32 4, %s19
          %s311 = smul.addr %s310, 2
          %s312 = sadd.s32 %s21, %s311
          %s313 = smul.addr %s18, 8
          %s314 = sadd.s32 %s312, %s313
          %s315 = smul.addr %s314, 8
          %s316 = scalar_lea.vmem %s1, %s315
          // Predicated region
          $region67: #{tpu_custom_call.1} parent=65 // pred_check
            _
          $region68: #{tpu_custom_call.1} parent=65 // pred_check_branch
            %318 = sbr.rel (0) target = $region70
          $region69: #{tpu_custom_call.1} parent=65 // pred_region
            // Predicated region
            $region71: #{tpu_custom_call.1} parent=69 // pred_check
              _
            $region72: #{tpu_custom_call.1} parent=69 // pred_check_branch
              %320 = sbr.rel (0) target = $region74
            $region73: #{tpu_custom_call.1} parent=69 // pred_region
              // Predicated region
              $region86: #{tpu_custom_call.1} parent=73 // pred_check
                _
              $region87: #{tpu_custom_call.1} parent=73 // pred_check_branch
                %342 = sbr.rel (0) target = $region89
              $region88: #{tpu_custom_call.1} parent=73 // pred_region
                loop: start=0, step=1, limit=1
                $region90: #{tpu_custom_call.1} parent=88 // loop_pre_header
                  _
                $region91: #{tpu_custom_call.1} parent=88 // loop_header
                  %s344 = sphi 0, %s348
                  %p345 = scmp.ge.s32.totalorder %s344, 1
                  %s349 = sphi %s316, %s316
                  %s350 = sphi %s309, %s309
                $region92: #{tpu_custom_call.1} parent=88 // loop_header_branch
                  %347 = sbr.rel (%p345) target = $region96
                $region93: #{tpu_custom_call.1} parent=88 // loop_body
                  %v351 = vld [vmem:[%s349] sm:$0xff]
                  %352 = vst [vmem:[%s350] sm:$0xff] %v351
                  %v353 = vld [vmem:[%s349 + $0x10] sm:$0xff]
                  %354 = vst [vmem:[%s350 + $0x8] sm:$0xff] %v353
                  %v355 = vld [vmem:[%s349 + $0x20] sm:$0xff]
                  %356 = vst [vmem:[%s350 + $0x10] sm:$0xff] %v355
                  %v357 = vld [vmem:[%s349 + $0x30] sm:$0xff]
                  %358 = vst [vmem:[%s350 + $0x18] sm:$0xff] %v357
                $region94: #{tpu_custom_call.1} parent=88 // loop_footer
                  %s348 = sadd.s32 1, %s344
                $region95: #{tpu_custom_call.1} parent=88 // loop_footer_branch
                  %343 = sbr.rel target = $region91
                $region96: #{tpu_custom_call.1} parent=88 // loop_exit
                  _
              $region89: #{tpu_custom_call.1} parent=73 // pred_fallthru
                _
              // Predicated region
              $region97: #{tpu_custom_call.1} parent=73 // pred_check
                _
              $region98: #{tpu_custom_call.1} parent=73 // pred_check_branch
                %360 = sbr.rel target = $region100
              $region99: #{tpu_custom_call.1} parent=73 // pred_region
                _
              $region100: #{tpu_custom_call.1} parent=73 // pred_fallthru
                _
            $region74: #{tpu_custom_call.1} parent=69 // pred_fallthru
              _
            // Predicated region
            $region75: #{tpu_custom_call.1} parent=69 // pred_check
              _
            $region76: #{tpu_custom_call.1} parent=69 // pred_check_branch
              %322 = sbr.rel target = $region78
            $region77: #{tpu_custom_call.1} parent=69 // pred_region
              %s324 = ssub.s32 256, 1
              loop: start=0, step=1, limit=1
              $region79: #{tpu_custom_call.1} parent=77 // loop_pre_header
                _
              $region80: #{tpu_custom_call.1} parent=77 // loop_header
                %s326 = sphi 0, %s330
                %p327 = scmp.ge.s32.totalorder %s326, 1
                %s331 = sphi %s316, %s316
                %s332 = sphi %s309, %s309
              $region81: #{tpu_custom_call.1} parent=77 // loop_header_branch
                %329 = sbr.rel (%p327) target = $region85
              $region82: #{tpu_custom_call.1} parent=77 // loop_body
                %v333 = vld [vmem:[%s331] sm:%s324]
                %334 = vst [vmem:[%s332] sm:%s324] %v333
                %v335 = vld [vmem:[%s331 + $0x10] sm:%s324]
                %336 = vst [vmem:[%s332 + $0x8] sm:%s324] %v335
                %v337 = vld [vmem:[%s331 + $0x20] sm:%s324]
                %338 = vst [vmem:[%s332 + $0x10] sm:%s324] %v337
                %v339 = vld [vmem:[%s331 + $0x30] sm:%s324]
                %340 = vst [vmem:[%s332 + $0x18] sm:%s324] %v339
              $region83: #{tpu_custom_call.1} parent=77 // loop_footer
                %s330 = sadd.s32 1, %s326
              $region84: #{tpu_custom_call.1} parent=77 // loop_footer_branch
                %325 = sbr.rel target = $region80
              $region85: #{tpu_custom_call.1} parent=77 // loop_exit
                _
            $region78: #{tpu_custom_call.1} parent=69 // pred_fallthru
              _
          $region70: #{tpu_custom_call.1} parent=65 // pred_fallthru
            _
          %361 = vnop
        $region66: #{tpu_custom_call.1} parent=23 // pred_fallthru
          _
        // Predicated region
        $region101: #{tpu_custom_call.1} parent=23 // pred_check
          %p362 = pneg %p121
        $region102: #{tpu_custom_call.1} parent=23 // pred_check_branch
          %364 = sbr.rel (%p362) target = $region104
        $region103: #{tpu_custom_call.1} parent=23 // pred_region
          %s365 = sand.u32 %s111, 1
          %s366 = sand.u32 %s111, 1
          %s367 = smul.addr %s366, 32
          %s368 = scalar_lea.vmem [#allocation7], %s367
          %s369 = smul.u32 4, %s19
          %s370 = smul.addr %s369, 2
          %s371 = sadd.s32 %s21, %s370
          %s372 = smul.addr %s18, 8
          %s373 = sadd.s32 %s371, %s372
          %s374 = smul.addr %s373, 8
          %s375 = scalar_lea.vmem %s2, %s374
          // Predicated region
          $region105: #{tpu_custom_call.1} parent=103 // pred_check
            _
          $region106: #{tpu_custom_call.1} parent=103 // pred_check_branch
            %377 = sbr.rel (0) target = $region108
          $region107: #{tpu_custom_call.1} parent=103 // pred_region
            // Predicated region
            $region109: #{tpu_custom_call.1} parent=107 // pred_check
              _
            $region110: #{tpu_custom_call.1} parent=107 // pred_check_branch
              %379 = sbr.rel (0) target = $region112
            $region111: #{tpu_custom_call.1} parent=107 // pred_region
              // Predicated region
              $region124: #{tpu_custom_call.1} parent=111 // pred_check
                _
              $region125: #{tpu_custom_call.1} parent=111 // pred_check_branch
                %401 = sbr.rel (0) target = $region127
              $region126: #{tpu_custom_call.1} parent=111 // pred_region
                loop: start=0, step=1, limit=1
                $region128: #{tpu_custom_call.1} parent=126 // loop_pre_header
                  _
                $region129: #{tpu_custom_call.1} parent=126 // loop_header
                  %s403 = sphi 0, %s407
                  %p404 = scmp.ge.s32.totalorder %s403, 1
                  %s408 = sphi %s375, %s375
                  %s409 = sphi %s368, %s368
                $region130: #{tpu_custom_call.1} parent=126 // loop_header_branch
                  %406 = sbr.rel (%p404) target = $region134
                $region131: #{tpu_custom_call.1} parent=126 // loop_body
                  %v410 = vld [vmem:[%s408] sm:$0xff]
                  %411 = vst [vmem:[%s409] sm:$0xff] %v410
                  %v412 = vld [vmem:[%s408 + $0x10] sm:$0xff]
                  %413 = vst [vmem:[%s409 + $0x8] sm:$0xff] %v412
                  %v414 = vld [vmem:[%s408 + $0x20] sm:$0xff]
                  %415 = vst [vmem:[%s409 + $0x10] sm:$0xff] %v414
                  %v416 = vld [vmem:[%s408 + $0x30] sm:$0xff]
                  %417 = vst [vmem:[%s409 + $0x18] sm:$0xff] %v416
                $region132: #{tpu_custom_call.1} parent=126 // loop_footer
                  %s407 = sadd.s32 1, %s403
                $region133: #{tpu_custom_call.1} parent=126 // loop_footer_branch
                  %402 = sbr.rel target = $region129
                $region134: #{tpu_custom_call.1} parent=126 // loop_exit
                  _
              $region127: #{tpu_custom_call.1} parent=111 // pred_fallthru
                _
              // Predicated region
              $region135: #{tpu_custom_call.1} parent=111 // pred_check
                _
              $region136: #{tpu_custom_call.1} parent=111 // pred_check_branch
                %419 = sbr.rel target = $region138
              $region137: #{tpu_custom_call.1} parent=111 // pred_region
                _
              $region138: #{tpu_custom_call.1} parent=111 // pred_fallthru
                _
            $region112: #{tpu_custom_call.1} parent=107 // pred_fallthru
              _
            // Predicated region
            $region113: #{tpu_custom_call.1} parent=107 // pred_check
              _
            $region114: #{tpu_custom_call.1} parent=107 // pred_check_branch
              %381 = sbr.rel target = $region116
            $region115: #{tpu_custom_call.1} parent=107 // pred_region
              %s383 = ssub.s32 256, 1
              loop: start=0, step=1, limit=1
              $region117: #{tpu_custom_call.1} parent=115 // loop_pre_header
                _
              $region118: #{tpu_custom_call.1} parent=115 // loop_header
                %s385 = sphi 0, %s389
                %p386 = scmp.ge.s32.totalorder %s385, 1
                %s390 = sphi %s375, %s375
                %s391 = sphi %s368, %s368
              $region119: #{tpu_custom_call.1} parent=115 // loop_header_branch
                %388 = sbr.rel (%p386) target = $region123
              $region120: #{tpu_custom_call.1} parent=115 // loop_body
                %v392 = vld [vmem:[%s390] sm:%s383]
                %393 = vst [vmem:[%s391] sm:%s383] %v392
                %v394 = vld [vmem:[%s390 + $0x10] sm:%s383]
                %395 = vst [vmem:[%s391 + $0x8] sm:%s383] %v394
                %v396 = vld [vmem:[%s390 + $0x20] sm:%s383]
                %397 = vst [vmem:[%s391 + $0x10] sm:%s383] %v396
                %v398 = vld [vmem:[%s390 + $0x30] sm:%s383]
                %399 = vst [vmem:[%s391 + $0x18] sm:%s383] %v398
              $region121: #{tpu_custom_call.1} parent=115 // loop_footer
                %s389 = sadd.s32 1, %s385
              $region122: #{tpu_custom_call.1} parent=115 // loop_footer_branch
                %384 = sbr.rel target = $region118
              $region123: #{tpu_custom_call.1} parent=115 // loop_exit
                _
            $region116: #{tpu_custom_call.1} parent=107 // pred_fallthru
              _
          $region108: #{tpu_custom_call.1} parent=103 // pred_fallthru
            _
          %420 = vnop
        $region104: #{tpu_custom_call.1} parent=23 // pred_fallthru
          _
      $region24: #{tpu_custom_call.1} parent=5 // pred_fallthru
        _
      %p421 = scmp.le.s32.totalorder 1, %s11
      %p422 = scmp.lt.s32.totalorder %s11, 9
      %p423 = pnand %p421, %p422
      %p424 = pneg %p423
      // Predicated region
      $region139: #{tpu_custom_call.1} parent=5 // pred_check
        _
      $region140: #{tpu_custom_call.1} parent=5 // pred_check_branch
        %426 = sbr.rel (%p423) target = $region142
      $region141: #{tpu_custom_call.1} parent=5 // pred_region
        %s427 = ssub.s32 %s11, 1
        %s428 = sand.u32 %s54, 1
        %s429 = sand.u32 %s54, 1
        %s430 = smul.addr %s429, 32
        %s431 = scalar_lea.vmem [#allocation5], %s430
        // Predicated region
        $region143: #{tpu_custom_call.1} parent=141 // pred_check
          %p432 = pneg %p67
        $region144: #{tpu_custom_call.1} parent=141 // pred_check_branch
          %434 = sbr.rel (%p432) target = $region146
        $region145: #{tpu_custom_call.1} parent=141 // pred_region
          _
        $region146: #{tpu_custom_call.1} parent=141 // pred_fallthru
          _
        %s435 = sand.u32 %s84, 1
        %s436 = sand.u32 %s84, 1
        %s437 = smul.addr %s436, 32
        %s438 = scalar_lea.vmem [#allocation6], %s437
        // Predicated region
        $region147: #{tpu_custom_call.1} parent=141 // pred_check
          %p439 = pneg %p97
        $region148: #{tpu_custom_call.1} parent=141 // pred_check_branch
          %441 = sbr.rel (%p439) target = $region150
        $region149: #{tpu_custom_call.1} parent=141 // pred_region
          _
        $region150: #{tpu_custom_call.1} parent=141 // pred_fallthru
          _
        %s442 = sand.u32 %s114, 1
        %s443 = sand.u32 %s114, 1
        %s444 = smul.addr %s443, 32
        %s445 = scalar_lea.vmem [#allocation7], %s444
        // Predicated region
        $region151: #{tpu_custom_call.1} parent=141 // pred_check
          %p446 = pneg %p127
        $region152: #{tpu_custom_call.1} parent=141 // pred_check_branch
          %448 = sbr.rel (%p446) target = $region154
        $region153: #{tpu_custom_call.1} parent=141 // pred_region
          _
        $region154: #{tpu_custom_call.1} parent=141 // pred_fallthru
          _
        %s449 = sand.u32 %s54, 1
        %s450 = sand.u32 %s54, 1
        %s451 = smul.addr %s450, 32
        %s452 = scalar_lea.vmem [#allocation5], %s451
        %p453 = pneg %p67
        %p454 = pneg %p64
        %s455 = sand.u32 %s84, 1
        %s456 = sand.u32 %s84, 1
        %s457 = smul.addr %s456, 32
        %s458 = scalar_lea.vmem [#allocation6], %s457
        %p459 = pneg %p97
        %p460 = pneg %p94
        %s461 = sand.u32 %s114, 1
        %s462 = sand.u32 %s114, 1
        %s463 = smul.addr %s462, 32
        %s464 = scalar_lea.vmem [#allocation7], %s463
        %p465 = pneg %p127
        %p466 = pneg %p124
        %s467 = smul.u32 4, %s23
        %p468 = scmp.lt.s32.totalorder %s467, 3
        %s469 = scalar_select %p468, %s467, 3
        %s470 = scalar_lea.vmem %s3, %s469
        %p471 = pneg %p153
        %p472 = pneg %p150
        %s473 = smul.u32 4, %s23
        %p474 = scmp.lt.s32.totalorder %s473, 3
        %s475 = scalar_select %p474, %s473, 3
        %s476 = scalar_lea.vmem %s4, %s475
        %p477 = pneg %p179
        %p478 = pneg %p176
        %p479 = pneg %p209
        %p480 = pneg %p206
        %s481 = sand.u32 %s196, 1
        %s482 = sand.u32 %s196, 1
        %s483 = smul.addr %s482, 32
        %s484 = scalar_lea.vmem [#allocation8], %s483
        %s485 = smul.u32 4, %s23
        %s486 = smul.u32 4, %s23
        %s487 = smul.u32 4, %s23
        %s488 = smul.u32 4, %s23
        %p489 = scmp.lt.s32.totalorder %s488, 3
        %s490 = scalar_select %p489, %s488, 3
        %s491 = scalar_lea.vmem %s3, %s490
        %s492 = smul.u32 4, %s23
        %s493 = smul.u32 4, %s23
        %p494 = scmp.lt.s32.totalorder %s493, 3
        %s495 = scalar_select %p494, %s493, 3
        %s496 = scalar_lea.vmem %s4, %s495
        %s497 = smul.u32 4, %s23
        %s498 = smul.u32 4, %s23
        %p499 = scmp.eq.s32.totalorder %s25, 0
        // Predicated region
        $region155: #{tpu_custom_call.1} parent=141 // pred_check
          %p500 = pneg %p499
        $region156: #{tpu_custom_call.1} parent=141 // pred_check_branch
          %502 = sbr.rel (%p500) target = $region158
        $region157: #{tpu_custom_call.1} parent=141 // pred_region
          %vm503 = vcmask 7168
          %504 = vst.msk [vmem:[#allocation2] sm:$0xff] %vm503, -inf
          %505 = vst.msk [vmem:[#allocation2 + $0x8] sm:$0xff] %vm503, -inf
          %506 = vst.msk [vmem:[#allocation2 + $0x10] sm:$0xff] %vm503, -inf
          %507 = vst.msk [vmem:[#allocation2 + $0x18] sm:$0xff] %vm503, -inf
          %508 = vst.msk [vmem:[#allocation3] sm:$0xff] %vm503, 0.0
          %509 = vst.msk [vmem:[#allocation3 + $0x8] sm:$0xff] %vm503, 0.0
          %510 = vst.msk [vmem:[#allocation3 + $0x10] sm:$0xff] %vm503, 0.0
          %511 = vst.msk [vmem:[#allocation3 + $0x18] sm:$0xff] %vm503, 0.0
          %vm512 = vcmask 64512
          %513 = vst.msk [vmem:[#allocation4] sm:$0xff] %vm512, 0.0
          %514 = vst.msk [vmem:[#allocation4 + $0x8] sm:$0xff] %vm512, 0.0
          %515 = vst.msk [vmem:[#allocation4 + $0x10] sm:$0xff] %vm512, 0.0
          %516 = vst.msk [vmem:[#allocation4 + $0x18] sm:$0xff] %vm512, 0.0
        $region158: #{tpu_custom_call.1} parent=141 // pred_fallthru
          _
        %v517 = vld [vmem:[%s431] sm:$0xff]
        %v518 = vld [vmem:[%s431 + $0x8] sm:$0xff]
        %v519 = vld [vmem:[%s431 + $0x10] sm:$0xff]
        %v520 = vld [vmem:[%s431 + $0x18] sm:$0xff]
        %v521 = vld [vmem:[%s438] sm:$0xff]
        %v522 = vld [vmem:[%s438 + $0x8] sm:$0xff]
        %v523 = vld [vmem:[%s438 + $0x10] sm:$0xff]
        %v524 = vld [vmem:[%s438 + $0x18] sm:$0xff]
        %v525 = vld [vmem:[%s445] sm:$0xff]
        %v526 = vld [vmem:[%s445 + $0x8] sm:$0xff]
        %v527 = vld [vmem:[%s445 + $0x10] sm:$0xff]
        %v528 = vld [vmem:[%s445 + $0x18] sm:$0xff]
        %s529 = smul.u32 %s24, 8
        %v530 = vlaneseq
        %v531 = vshrl.u32 %v530, 7
        %v532 = vstv %s529
        %v533 = vadd.s32 %v532, %v531
        %s534 = smul.u32 %s25, 8
        %v535 = vlaneseq
        %v536 = vand.u32 %v535, 127
        %v537 = vstv %s534
        %v538 = vadd.s32 %v537, %v536
        %v539 = vld [vmem:[%s496] sm:$0x1]
        %v540 = vld [vmem:[%s496 + $0x1] sm:$0x1]
        %v541 = vld [vmem:[%s496 + $0x2] sm:$0x1]
        %v542 = vld [vmem:[%s496 + $0x3] sm:$0x1]
        %v543 = vsub.s32 %v533, %v538
        %v544 = vlaneseq
        %v545 = vshrl.u32 %v544, 7
        %v546 = vsub.s32 0, %v545
        %v547 = vrot.slane %v539, %v546
        %v548 = vlaneseq
        %v549 = vshrl.u32 %v548, 7
        %v550 = vsub.s32 0, %v549
        %v551 = vrot.slane %v540, %v550
        %v552 = vlaneseq
        %v553 = vshrl.u32 %v552, 7
        %v554 = vsub.s32 0, %v553
        %v555 = vrot.slane %v541, %v554
        %v556 = vlaneseq
        %v557 = vshrl.u32 %v556, 7
        %v558 = vsub.s32 0, %v557
        %v559 = vrot.slane %v542, %v558
        %560 = vset.pattern.permute.xlu0 0
        %561 = vperm.xlu0 %560, %v547
        %v562 = vpop.permute.xlu0 %561
        %563 = vset.pattern.permute.xlu0 0
        %564 = vperm.xlu0 %563, %v551
        %v565 = vpop.permute.xlu0 %564
        %566 = vset.pattern.permute.xlu0 0
        %567 = vperm.xlu0 %566, %v555
        %v568 = vpop.permute.xlu0 %567
        %569 = vset.pattern.permute.xlu0 0
        %570 = vperm.xlu0 %569, %v559
        %v571 = vpop.permute.xlu0 %570
        %v572 = vmul.u32 %v562, %v543
        %v573 = vmul.u32 %v565, %v543
        %v574 = vmul.u32 %v568, %v543
        %v575 = vmul.u32 %v571, %v543
        %vm576 = vcmp.ge.s32.totalorder %v572, 0
        %vm577 = vcmp.ge.s32.totalorder %v573, 0
        %vm578 = vcmp.ge.s32.totalorder %v574, 0
        %vm579 = vcmp.ge.s32.totalorder %v575, 0
        %v580 = vld [vmem:[%s491] sm:$0x1]
        %v581 = vld [vmem:[%s491 + $0x1] sm:$0x1]
        %v582 = vld [vmem:[%s491 + $0x2] sm:$0x1]
        %v583 = vld [vmem:[%s491 + $0x3] sm:$0x1]
        %v584 = vsub.f32 0.0, %v580
        %v585 = vsub.f32 0.0, %v581
        %v586 = vsub.f32 0.0, %v582
        %v587 = vsub.f32 0.0, %v583
        %v588 = vcvt.s32.f32 %v572
        %v589 = vcvt.s32.f32 %v573
        %v590 = vcvt.s32.f32 %v574
        %v591 = vcvt.s32.f32 %v575
        %v596 = vlaneseq
        %v597 = vshrl.u32 %v596, 7
        %v598 = vsub.s32 0, %v597
        %v599 = vrot.slane %v584, %v598
        %v600 = vlaneseq
        %v601 = vshrl.u32 %v600, 7
        %v602 = vsub.s32 0, %v601
        %v603 = vrot.slane %v585, %v602
        %v604 = vlaneseq
        %v605 = vshrl.u32 %v604, 7
        %v606 = vsub.s32 0, %v605
        %v607 = vrot.slane %v586, %v606
        %v608 = vlaneseq
        %v609 = vshrl.u32 %v608, 7
        %v610 = vsub.s32 0, %v609
        %v611 = vrot.slane %v587, %v610
        %612 = vset.pattern.permute.xlu0 0
        %613 = vperm.xlu0 %612, %v599
        %v614 = vpop.permute.xlu0 %613
        %616 = vset.pattern.permute.xlu0 0
        %617 = vperm.xlu0 %616, %v603
        %v618 = vpop.permute.xlu0 %617
        %620 = vset.pattern.permute.xlu0 0
        %621 = vperm.xlu0 %620, %v607
        %v622 = vpop.permute.xlu0 %621
        %624 = vset.pattern.permute.xlu0 0
        %625 = vperm.xlu0 %624, %v611
        %v626 = vpop.permute.xlu0 %625
        %v628 = vmul.f32 %v614, %v588
        %v629 = vmul.f32 %v618, %v589
        %v630 = vmul.f32 %v622, %v590
        %v631 = vmul.f32 %v626, %v591
        %v632 = vsel %vm576, %v628, -1e+09
        %v633 = vsel %vm577, %v629, -1e+09
        %v634 = vsel %vm578, %v630, -1e+09
        %v635 = vsel %vm579, %v631, -1e+09
        %vm636 = vcmask 64512
        %v638 = vsel %vm636, %v517, 0
        %v641 = vsel %vm636, %v521, 0
        %643 = vmatprep.subr.mxu0 0.0
        %644 = vmatpush1.xpose.msra.mxu0 0.0
        %645 = vmatprep.subr.mxu0 0.0
        %646 = vmatpush1.xpose.msra.mxu0 0.0
        %647 = vmatprep.subr.mxu0 0.0
        %648 = vmatpush1.xpose.msra.mxu0 0.0
        %649 = vmatprep.subr.mxu0 0.0
        %650 = vmatpush1.xpose.msra.mxu0 0.0
        %651 = vmatprep.subr.mxu0 0.0
        %652 = vmatpush1.xpose.msra.mxu0 0.0
        %653 = vmatprep.subr.mxu0 0.0
        %654 = vmatpush1.xpose.msra.mxu0 0.0
        %655 = vmatprep.subr.mxu0 0.0
        %656 = vmatpush1.xpose.msra.mxu0 0.0
        %657 = vmatprep.subr.mxu0 0.0
        %658 = vmatpush1.xpose.msra.mxu0 0.0
        %659 = vmatprep.subr.mxu0 0.0
        %660 = vmatpush1.xpose.msra.mxu0 0.0
        %661 = vmatprep.subr.mxu0 0.0
        %662 = vmatpush1.xpose.msra.mxu0 0.0
        %663 = vmatprep.subr.mxu0 0.0
        %664 = vmatpush1.xpose.msra.mxu0 0.0
        %665 = vmatprep.subr.mxu0 0.0
        %666 = vmatpush1.xpose.msra.mxu0 0.0
        %667 = vmatprep.subr.mxu0 0.0
        %668 = vmatpush1.xpose.msra.mxu0 0.0
        %669 = vmatprep.subr.mxu0 0.0
        %670 = vmatpush1.xpose.msra.mxu0 0.0
        %671 = vmatprep.subr.mxu0 0.0
        %672 = vmatpush1.xpose.msra.mxu0 0.0
        %673 = vmatprep.subr.mxu0 0.0
        %674 = vmatpush1.xpose.msra.mxu0 %v641
        %675 = vmatprep.subr.mxu0 0.0
        %676 = vmatpush2.xpose.msra.mxu0 0.0
        %677 = vmatprep.subr.mxu0 0.0
        %678 = vmatpush2.xpose.msra.mxu0 0.0
        %679 = vmatprep.subr.mxu0 0.0
        %680 = vmatpush2.xpose.msra.mxu0 0.0
        %681 = vmatprep.subr.mxu0 0.0
        %682 = vmatpush2.xpose.msra.mxu0 0.0
        %683 = vmatprep.subr.mxu0 0.0
        %684 = vmatpush2.xpose.msra.mxu0 0.0
        %685 = vmatprep.subr.mxu0 0.0
        %686 = vmatpush2.xpose.msra.mxu0 0.0
        %687 = vmatprep.subr.mxu0 0.0
        %688 = vmatpush2.xpose.msra.mxu0 0.0
        %689 = vmatprep.subr.mxu0 0.0
        %690 = vmatpush2.xpose.msra.mxu0 0.0
        %691 = vmatprep.subr.mxu0 0.0
        %692 = vmatpush2.xpose.msra.mxu0 0.0
        %693 = vmatprep.subr.mxu0 0.0
        %694 = vmatpush2.xpose.msra.mxu0 0.0
        %695 = vmatprep.subr.mxu0 0.0
        %696 = vmatpush2.xpose.msra.mxu0 0.0
        %697 = vmatprep.subr.mxu0 0.0
        %698 = vmatpush2.xpose.msra.mxu0 0.0
        %699 = vmatprep.subr.mxu0 0.0
        %700 = vmatpush2.xpose.msra.mxu0 0.0
        %701 = vmatprep.subr.mxu0 0.0
        %702 = vmatpush2.xpose.msra.mxu0 0.0
        %703 = vmatprep.subr.mxu0 0.0
        %704 = vmatpush2.xpose.msra.mxu0 0.0
        %705 = vmatprep.subr.mxu0 0.0
        %706 = vmatpush2.xpose.msra.mxu0 0.0
        %707 = vmatprep.mubr.f32.mxu0 0.0
        %708 = vmatmul.mubr.f32.gmra.mxu0 %v638
        %v709 = vpop.f32.mrf.mxu0
        %v710 = vadd.f32 %v632, %v709
        %v711 = vpop.f32.mrf.mxu0
        %712 = vdwg.mxu0
        %v714 = vsel %vm636, %v518, 0
        %v717 = vsel %vm636, %v522, 0
        %719 = vmatprep.subr.mxu0 0.0
        %720 = vmatpush1.xpose.msra.mxu0 0.0
        %721 = vmatprep.subr.mxu0 0.0
        %722 = vmatpush1.xpose.msra.mxu0 0.0
        %723 = vmatprep.subr.mxu0 0.0
        %724 = vmatpush1.xpose.msra.mxu0 0.0
        %725 = vmatprep.subr.mxu0 0.0
        %726 = vmatpush1.xpose.msra.mxu0 0.0
        %727 = vmatprep.subr.mxu0 0.0
        %728 = vmatpush1.xpose.msra.mxu0 0.0
        %729 = vmatprep.subr.mxu0 0.0
        %730 = vmatpush1.xpose.msra.mxu0 0.0
        %731 = vmatprep.subr.mxu0 0.0
        %732 = vmatpush1.xpose.msra.mxu0 0.0
        %733 = vmatprep.subr.mxu0 0.0
        %734 = vmatpush1.xpose.msra.mxu0 0.0
        %735 = vmatprep.subr.mxu0 0.0
        %736 = vmatpush1.xpose.msra.mxu0 0.0
        %737 = vmatprep.subr.mxu0 0.0
        %738 = vmatpush1.xpose.msra.mxu0 0.0
        %739 = vmatprep.subr.mxu0 0.0
        %740 = vmatpush1.xpose.msra.mxu0 0.0
        %741 = vmatprep.subr.mxu0 0.0
        %742 = vmatpush1.xpose.msra.mxu0 0.0
        %743 = vmatprep.subr.mxu0 0.0
        %744 = vmatpush1.xpose.msra.mxu0 0.0
        %745 = vmatprep.subr.mxu0 0.0
        %746 = vmatpush1.xpose.msra.mxu0 0.0
        %747 = vmatprep.subr.mxu0 0.0
        %748 = vmatpush1.xpose.msra.mxu0 0.0
        %749 = vmatprep.subr.mxu0 0.0
        %750 = vmatpush1.xpose.msra.mxu0 %v717
        %751 = vmatprep.subr.mxu0 0.0
        %752 = vmatpush2.xpose.msra.mxu0 0.0
        %753 = vmatprep.subr.mxu0 0.0
        %754 = vmatpush2.xpose.msra.mxu0 0.0
        %755 = vmatprep.subr.mxu0 0.0
        %756 = vmatpush2.xpose.msra.mxu0 0.0
        %757 = vmatprep.subr.mxu0 0.0
        %758 = vmatpush2.xpose.msra.mxu0 0.0
        %759 = vmatprep.subr.mxu0 0.0
        %760 = vmatpush2.xpose.msra.mxu0 0.0
        %761 = vmatprep.subr.mxu0 0.0
        %762 = vmatpush2.xpose.msra.mxu0 0.0
        %763 = vmatprep.subr.mxu0 0.0
        %764 = vmatpush2.xpose.msra.mxu0 0.0
        %765 = vmatprep.subr.mxu0 0.0
        %766 = vmatpush2.xpose.msra.mxu0 0.0
        %767 = vmatprep.subr.mxu0 0.0
        %768 = vmatpush2.xpose.msra.mxu0 0.0
        %769 = vmatprep.subr.mxu0 0.0
        %770 = vmatpush2.xpose.msra.mxu0 0.0
        %771 = vmatprep.subr.mxu0 0.0
        %772 = vmatpush2.xpose.msra.mxu0 0.0
        %773 = vmatprep.subr.mxu0 0.0
        %774 = vmatpush2.xpose.msra.mxu0 0.0
        %775 = vmatprep.subr.mxu0 0.0
        %776 = vmatpush2.xpose.msra.mxu0 0.0
        %777 = vmatprep.subr.mxu0 0.0
        %778 = vmatpush2.xpose.msra.mxu0 0.0
        %779 = vmatprep.subr.mxu0 0.0
        %780 = vmatpush2.xpose.msra.mxu0 0.0
        %781 = vmatprep.subr.mxu0 0.0
        %782 = vmatpush2.xpose.msra.mxu0 0.0
        %783 = vmatprep.mubr.f32.mxu0 0.0
        %784 = vmatmul.mubr.f32.gmra.mxu0 %v714
        %v785 = vpop.f32.mrf.mxu0
        %v786 = vadd.f32 %v633, %v785
        %v787 = vpop.f32.mrf.mxu0
        %788 = vdwg.mxu0
        %v790 = vsel %vm636, %v519, 0
        %v793 = vsel %vm636, %v523, 0
        %795 = vmatprep.subr.mxu0 0.0
        %796 = vmatpush1.xpose.msra.mxu0 0.0
        %797 = vmatprep.subr.mxu0 0.0
        %798 = vmatpush1.xpose.msra.mxu0 0.0
        %799 = vmatprep.subr.mxu0 0.0
        %800 = vmatpush1.xpose.msra.mxu0 0.0
        %801 = vmatprep.subr.mxu0 0.0
        %802 = vmatpush1.xpose.msra.mxu0 0.0
        %803 = vmatprep.subr.mxu0 0.0
        %804 = vmatpush1.xpose.msra.mxu0 0.0
        %805 = vmatprep.subr.mxu0 0.0
        %806 = vmatpush1.xpose.msra.mxu0 0.0
        %807 = vmatprep.subr.mxu0 0.0
        %808 = vmatpush1.xpose.msra.mxu0 0.0
        %809 = vmatprep.subr.mxu0 0.0
        %810 = vmatpush1.xpose.msra.mxu0 0.0
        %811 = vmatprep.subr.mxu0 0.0
        %812 = vmatpush1.xpose.msra.mxu0 0.0
        %813 = vmatprep.subr.mxu0 0.0
        %814 = vmatpush1.xpose.msra.mxu0 0.0
        %815 = vmatprep.subr.mxu0 0.0
        %816 = vmatpush1.xpose.msra.mxu0 0.0
        %817 = vmatprep.subr.mxu0 0.0
        %818 = vmatpush1.xpose.msra.mxu0 0.0
        %819 = vmatprep.subr.mxu0 0.0
        %820 = vmatpush1.xpose.msra.mxu0 0.0
        %821 = vmatprep.subr.mxu0 0.0
        %822 = vmatpush1.xpose.msra.mxu0 0.0
        %823 = vmatprep.subr.mxu0 0.0
        %824 = vmatpush1.xpose.msra.mxu0 0.0
        %825 = vmatprep.subr.mxu0 0.0
        %826 = vmatpush1.xpose.msra.mxu0 %v793
        %827 = vmatprep.subr.mxu0 0.0
        %828 = vmatpush2.xpose.msra.mxu0 0.0
        %829 = vmatprep.subr.mxu0 0.0
        %830 = vmatpush2.xpose.msra.mxu0 0.0
        %831 = vmatprep.subr.mxu0 0.0
        %832 = vmatpush2.xpose.msra.mxu0 0.0
        %833 = vmatprep.subr.mxu0 0.0
        %834 = vmatpush2.xpose.msra.mxu0 0.0
        %835 = vmatprep.subr.mxu0 0.0
        %836 = vmatpush2.xpose.msra.mxu0 0.0
        %837 = vmatprep.subr.mxu0 0.0
        %838 = vmatpush2.xpose.msra.mxu0 0.0
        %839 = vmatprep.subr.mxu0 0.0
        %840 = vmatpush2.xpose.msra.mxu0 0.0
        %841 = vmatprep.subr.mxu0 0.0
        %842 = vmatpush2.xpose.msra.mxu0 0.0
        %843 = vmatprep.subr.mxu0 0.0
        %844 = vmatpush2.xpose.msra.mxu0 0.0
        %845 = vmatprep.subr.mxu0 0.0
        %846 = vmatpush2.xpose.msra.mxu0 0.0
        %847 = vmatprep.subr.mxu0 0.0
        %848 = vmatpush2.xpose.msra.mxu0 0.0
        %849 = vmatprep.subr.mxu0 0.0
        %850 = vmatpush2.xpose.msra.mxu0 0.0
        %851 = vmatprep.subr.mxu0 0.0
        %852 = vmatpush2.xpose.msra.mxu0 0.0
        %853 = vmatprep.subr.mxu0 0.0
        %854 = vmatpush2.xpose.msra.mxu0 0.0
        %855 = vmatprep.subr.mxu0 0.0
        %856 = vmatpush2.xpose.msra.mxu0 0.0
        %857 = vmatprep.subr.mxu0 0.0
        %858 = vmatpush2.xpose.msra.mxu0 0.0
        %859 = vmatprep.mubr.f32.mxu0 0.0
        %860 = vmatmul.mubr.f32.gmra.mxu0 %v790
        %v861 = vpop.f32.mrf.mxu0
        %v862 = vadd.f32 %v634, %v861
        %v863 = vpop.f32.mrf.mxu0
        %864 = vdwg.mxu0
        %v866 = vsel %vm636, %v520, 0
        %v869 = vsel %vm636, %v524, 0
        %871 = vmatprep.subr.mxu0 0.0
        %872 = vmatpush1.xpose.msra.mxu0 0.0
        %873 = vmatprep.subr.mxu0 0.0
        %874 = vmatpush1.xpose.msra.mxu0 0.0
        %875 = vmatprep.subr.mxu0 0.0
        %876 = vmatpush1.xpose.msra.mxu0 0.0
        %877 = vmatprep.subr.mxu0 0.0
        %878 = vmatpush1.xpose.msra.mxu0 0.0
        %879 = vmatprep.subr.mxu0 0.0
        %880 = vmatpush1.xpose.msra.mxu0 0.0
        %881 = vmatprep.subr.mxu0 0.0
        %882 = vmatpush1.xpose.msra.mxu0 0.0
        %883 = vmatprep.subr.mxu0 0.0
        %884 = vmatpush1.xpose.msra.mxu0 0.0
        %885 = vmatprep.subr.mxu0 0.0
        %886 = vmatpush1.xpose.msra.mxu0 0.0
        %887 = vmatprep.subr.mxu0 0.0
        %888 = vmatpush1.xpose.msra.mxu0 0.0
        %889 = vmatprep.subr.mxu0 0.0
        %890 = vmatpush1.xpose.msra.mxu0 0.0
        %891 = vmatprep.subr.mxu0 0.0
        %892 = vmatpush1.xpose.msra.mxu0 0.0
        %893 = vmatprep.subr.mxu0 0.0
        %894 = vmatpush1.xpose.msra.mxu0 0.0
        %895 = vmatprep.subr.mxu0 0.0
        %896 = vmatpush1.xpose.msra.mxu0 0.0
        %897 = vmatprep.subr.mxu0 0.0
        %898 = vmatpush1.xpose.msra.mxu0 0.0
        %899 = vmatprep.subr.mxu0 0.0
        %900 = vmatpush1.xpose.msra.mxu0 0.0
        %901 = vmatprep.subr.mxu0 0.0
        %902 = vmatpush1.xpose.msra.mxu0 %v869
        %903 = vmatprep.subr.mxu0 0.0
        %904 = vmatpush2.xpose.msra.mxu0 0.0
        %905 = vmatprep.subr.mxu0 0.0
        %906 = vmatpush2.xpose.msra.mxu0 0.0
        %907 = vmatprep.subr.mxu0 0.0
        %908 = vmatpush2.xpose.msra.mxu0 0.0
        %909 = vmatprep.subr.mxu0 0.0
        %910 = vmatpush2.xpose.msra.mxu0 0.0
        %911 = vmatprep.subr.mxu0 0.0
        %912 = vmatpush2.xpose.msra.mxu0 0.0
        %913 = vmatprep.subr.mxu0 0.0
        %914 = vmatpush2.xpose.msra.mxu0 0.0
        %915 = vmatprep.subr.mxu0 0.0
        %916 = vmatpush2.xpose.msra.mxu0 0.0
        %917 = vmatprep.subr.mxu0 0.0
        %918 = vmatpush2.xpose.msra.mxu0 0.0
        %919 = vmatprep.subr.mxu0 0.0
        %920 = vmatpush2.xpose.msra.mxu0 0.0
        %921 = vmatprep.subr.mxu0 0.0
        %922 = vmatpush2.xpose.msra.mxu0 0.0
        %923 = vmatprep.subr.mxu0 0.0
        %924 = vmatpush2.xpose.msra.mxu0 0.0
        %925 = vmatprep.subr.mxu0 0.0
        %926 = vmatpush2.xpose.msra.mxu0 0.0
        %927 = vmatprep.subr.mxu0 0.0
        %928 = vmatpush2.xpose.msra.mxu0 0.0
        %929 = vmatprep.subr.mxu0 0.0
        %930 = vmatpush2.xpose.msra.mxu0 0.0
        %931 = vmatprep.subr.mxu0 0.0
        %932 = vmatpush2.xpose.msra.mxu0 0.0
        %933 = vmatprep.subr.mxu0 0.0
        %934 = vmatpush2.xpose.msra.mxu0 0.0
        %935 = vmatprep.mubr.f32.mxu0 0.0
        %936 = vmatmul.mubr.f32.gmra.mxu0 %v866
        %v937 = vpop.f32.mrf.mxu0
        %v938 = vadd.f32 %v635, %v937
        %v939 = vpop.f32.mrf.mxu0
        %940 = vdwg.mxu0
        %v941 = vld [vmem:[#allocation2] sm:$0xff]
        %v942 = vld [vmem:[#allocation2 + $0x8] sm:$0xff]
        %v943 = vld [vmem:[#allocation2 + $0x10] sm:$0xff]
        %v944 = vld [vmem:[#allocation2 + $0x18] sm:$0xff]
        %v945 = vsel %vm636, %v710, -inf
        %946 = vmax.xlane.f32.xlu0 %v945
        %v947 = vpop.xlane.xlu0 %946
        %v948 = vsel %vm636, %v786, -inf
        %949 = vmax.xlane.f32.xlu0 %v948
        %v950 = vpop.xlane.xlu0 %949
        %v951 = vsel %vm636, %v862, -inf
        %952 = vmax.xlane.f32.xlu0 %v951
        %v953 = vpop.xlane.xlu0 %952
        %v954 = vsel %vm636, %v938, -inf
        %955 = vmax.xlane.f32.xlu0 %v954
        %v956 = vpop.xlane.xlu0 %955
        %v957 = vmax.f32 %v941, %v947
        %v958 = vmax.f32 %v942, %v950
        %v959 = vmax.f32 %v943, %v953
        %v960 = vmax.f32 %v944, %v956
        %v961 = vsub.f32 %v941, %v957
        %v962 = vsub.f32 %v942, %v958
        %v963 = vsub.f32 %v943, %v959
        %v964 = vsub.f32 %v944, %v960
        %v965 = vmul.f32 %v961, 1.442695
        %v966 = vpow.pop %v965
        %v967 = vmul.f32 %v962, 1.442695
        %v968 = vpow.pop %v967
        %v969 = vmul.f32 %v963, 1.442695
        %v970 = vpow.pop %v969
        %v971 = vmul.f32 %v964, 1.442695
        %v972 = vpow.pop %v971
        %974 = vset.pattern.permute.xlu0 0
        %975 = vperm.xlu0 %974, %v957
        %v976 = vpop.permute.xlu0 %975
        %979 = vset.pattern.permute.xlu0 0
        %980 = vperm.xlu0 %979, %v958
        %v981 = vpop.permute.xlu0 %980
        %984 = vset.pattern.permute.xlu0 0
        %985 = vperm.xlu0 %984, %v959
        %v986 = vpop.permute.xlu0 %985
        %989 = vset.pattern.permute.xlu0 0
        %990 = vperm.xlu0 %989, %v960
        %v991 = vpop.permute.xlu0 %990
        %v993 = vsub.f32 %v710, %v976
        %v994 = vsub.f32 %v786, %v981
        %v995 = vsub.f32 %v862, %v986
        %v996 = vsub.f32 %v938, %v991
        %v997 = vmul.f32 %v993, 1.442695
        %v998 = vpow.pop %v997
        %v999 = vmul.f32 %v994, 1.442695
        %v1000 = vpow.pop %v999
        %v1001 = vmul.f32 %v995, 1.442695
        %v1002 = vpow.pop %v1001
        %v1003 = vmul.f32 %v996, 1.442695
        %v1004 = vpow.pop %v1003
        %v1005 = vld [vmem:[#allocation3] sm:$0xff]
        %v1006 = vld [vmem:[#allocation3 + $0x8] sm:$0xff]
        %v1007 = vld [vmem:[#allocation3 + $0x10] sm:$0xff]
        %v1008 = vld [vmem:[#allocation3 + $0x18] sm:$0xff]
        %v1009 = vmul.f32 %v966, %v1005
        %v1010 = vmul.f32 %v968, %v1006
        %v1011 = vmul.f32 %v970, %v1007
        %v1012 = vmul.f32 %v972, %v1008
        %v1013 = vsel %vm636, %v998, 0.0
        %1014 = vadd.xlane.f32.xlu0 %v1013
        %v1015 = vpop.xlane.xlu0 %1014
        %v1016 = vsel %vm636, %v1000, 0.0
        %1017 = vadd.xlane.f32.xlu0 %v1016
        %v1018 = vpop.xlane.xlu0 %1017
        %v1019 = vsel %vm636, %v1002, 0.0
        %1020 = vadd.xlane.f32.xlu0 %v1019
        %v1021 = vpop.xlane.xlu0 %1020
        %v1022 = vsel %vm636, %v1004, 0.0
        %1023 = vadd.xlane.f32.xlu0 %v1022
        %v1024 = vpop.xlane.xlu0 %1023
        %v1025 = vadd.f32 %v1009, %v1015
        %v1026 = vadd.f32 %v1010, %v1018
        %v1027 = vadd.f32 %v1011, %v1021
        %v1028 = vadd.f32 %v1012, %v1024
        %vm1029 = vcmask 7168
        %1030 = vst.msk [vmem:[#allocation3] sm:$0xff] %vm1029, %v1025
        %1031 = vst.msk [vmem:[#allocation3 + $0x8] sm:$0xff] %vm1029, %v1026
        %1032 = vst.msk [vmem:[#allocation3 + $0x10] sm:$0xff] %vm1029, %v1027
        %1033 = vst.msk [vmem:[#allocation3 + $0x18] sm:$0xff] %vm1029, %v1028
        %v1034 = vld [vmem:[#allocation4] sm:$0xff]
        %v1035 = vld [vmem:[#allocation4 + $0x8] sm:$0xff]
        %v1036 = vld [vmem:[#allocation4 + $0x10] sm:$0xff]
        %v1037 = vld [vmem:[#allocation4 + $0x18] sm:$0xff]
        %1039 = vset.pattern.permute.xlu0 0
        %1040 = vperm.xlu0 %1039, %v966
        %v1041 = vpop.permute.xlu0 %1040
        %1044 = vset.pattern.permute.xlu0 0
        %1045 = vperm.xlu0 %1044, %v968
        %v1046 = vpop.permute.xlu0 %1045
        %1049 = vset.pattern.permute.xlu0 0
        %1050 = vperm.xlu0 %1049, %v970
        %v1051 = vpop.permute.xlu0 %1050
        %1054 = vset.pattern.permute.xlu0 0
        %1055 = vperm.xlu0 %1054, %v972
        %v1056 = vpop.permute.xlu0 %1055
        %v1058 = vmul.f32 %v1041, %v1034
        %v1059 = vmul.f32 %v1046, %v1035
        %v1060 = vmul.f32 %v1051, %v1036
        %v1061 = vmul.f32 %v1056, %v1037
        %v1063 = vsel %vm636, %v998, 0
        %1065 = vmatprep.subr.mxu0 0.0
        %1066 = vmatpush1.msra.mxu0 0.0
        %1067 = vmatprep.subr.mxu0 0.0
        %1068 = vmatpush1.msra.mxu0 0.0
        %1069 = vmatprep.subr.mxu0 0.0
        %1070 = vmatpush1.msra.mxu0 0.0
        %1071 = vmatprep.subr.mxu0 0.0
        %1072 = vmatpush1.msra.mxu0 0.0
        %1073 = vmatprep.subr.mxu0 0.0
        %1074 = vmatpush1.msra.mxu0 0.0
        %1075 = vmatprep.subr.mxu0 0.0
        %1076 = vmatpush1.msra.mxu0 0.0
        %1077 = vmatprep.subr.mxu0 0.0
        %1078 = vmatpush1.msra.mxu0 0.0
        %1079 = vmatprep.subr.mxu0 0.0
        %1080 = vmatpush1.msra.mxu0 0.0
        %1081 = vmatprep.subr.mxu0 0.0
        %1082 = vmatpush1.msra.mxu0 0.0
        %1083 = vmatprep.subr.mxu0 0.0
        %1084 = vmatpush1.msra.mxu0 0.0
        %1085 = vmatprep.subr.mxu0 0.0
        %1086 = vmatpush1.msra.mxu0 0.0
        %1087 = vmatprep.subr.mxu0 0.0
        %1088 = vmatpush1.msra.mxu0 0.0
        %1089 = vmatprep.subr.mxu0 0.0
        %1090 = vmatpush1.msra.mxu0 0.0
        %1091 = vmatprep.subr.mxu0 0.0
        %1092 = vmatpush1.msra.mxu0 0.0
        %1093 = vmatprep.subr.mxu0 0.0
        %1094 = vmatpush1.msra.mxu0 0.0
        %1095 = vmatprep.subr.mxu0 0.0
        %1096 = vmatpush1.msra.mxu0 %v525
        %1097 = vmatprep.subr.mxu0 0.0
        %1098 = vmatpush2.msra.mxu0 0.0
        %1099 = vmatprep.subr.mxu0 0.0
        %1100 = vmatpush2.msra.mxu0 0.0
        %1101 = vmatprep.subr.mxu0 0.0
        %1102 = vmatpush2.msra.mxu0 0.0
        %1103 = vmatprep.subr.mxu0 0.0
        %1104 = vmatpush2.msra.mxu0 0.0
        %1105 = vmatprep.subr.mxu0 0.0
        %1106 = vmatpush2.msra.mxu0 0.0
        %1107 = vmatprep.subr.mxu0 0.0
        %1108 = vmatpush2.msra.mxu0 0.0
        %1109 = vmatprep.subr.mxu0 0.0
        %1110 = vmatpush2.msra.mxu0 0.0
        %1111 = vmatprep.subr.mxu0 0.0
        %1112 = vmatpush2.msra.mxu0 0.0
        %1113 = vmatprep.subr.mxu0 0.0
        %1114 = vmatpush2.msra.mxu0 0.0
        %1115 = vmatprep.subr.mxu0 0.0
        %1116 = vmatpush2.msra.mxu0 0.0
        %1117 = vmatprep.subr.mxu0 0.0
        %1118 = vmatpush2.msra.mxu0 0.0
        %1119 = vmatprep.subr.mxu0 0.0
        %1120 = vmatpush2.msra.mxu0 0.0
        %1121 = vmatprep.subr.mxu0 0.0
        %1122 = vmatpush2.msra.mxu0 0.0
        %1123 = vmatprep.subr.mxu0 0.0
        %1124 = vmatpush2.msra.mxu0 0.0
        %1125 = vmatprep.subr.mxu0 0.0
        %1126 = vmatpush2.msra.mxu0 0.0
        %1127 = vmatprep.subr.mxu0 0.0
        %1128 = vmatpush2.msra.mxu0 0.0
        %1129 = vmatprep.mubr.f32.mxu0 0.0
        %1130 = vmatmul.mubr.f32.gmra.mxu0 %v1063
        %v1131 = vpop.f32.mrf.mxu0
        %v1132 = vadd.f32 0.0, %v1131
        %v1133 = vpop.f32.mrf.mxu0
        %1134 = vdwg.mxu0
        %v1136 = vsel %vm636, %v1000, 0
        %1138 = vmatprep.subr.mxu0 0.0
        %1139 = vmatpush1.msra.mxu0 0.0
        %1140 = vmatprep.subr.mxu0 0.0
        %1141 = vmatpush1.msra.mxu0 0.0
        %1142 = vmatprep.subr.mxu0 0.0
        %1143 = vmatpush1.msra.mxu0 0.0
        %1144 = vmatprep.subr.mxu0 0.0
        %1145 = vmatpush1.msra.mxu0 0.0
        %1146 = vmatprep.subr.mxu0 0.0
        %1147 = vmatpush1.msra.mxu0 0.0
        %1148 = vmatprep.subr.mxu0 0.0
        %1149 = vmatpush1.msra.mxu0 0.0
        %1150 = vmatprep.subr.mxu0 0.0
        %1151 = vmatpush1.msra.mxu0 0.0
        %1152 = vmatprep.subr.mxu0 0.0
        %1153 = vmatpush1.msra.mxu0 0.0
        %1154 = vmatprep.subr.mxu0 0.0
        %1155 = vmatpush1.msra.mxu0 0.0
        %1156 = vmatprep.subr.mxu0 0.0
        %1157 = vmatpush1.msra.mxu0 0.0
        %1158 = vmatprep.subr.mxu0 0.0
        %1159 = vmatpush1.msra.mxu0 0.0
        %1160 = vmatprep.subr.mxu0 0.0
        %1161 = vmatpush1.msra.mxu0 0.0
        %1162 = vmatprep.subr.mxu0 0.0
        %1163 = vmatpush1.msra.mxu0 0.0
        %1164 = vmatprep.subr.mxu0 0.0
        %1165 = vmatpush1.msra.mxu0 0.0
        %1166 = vmatprep.subr.mxu0 0.0
        %1167 = vmatpush1.msra.mxu0 0.0
        %1168 = vmatprep.subr.mxu0 0.0
        %1169 = vmatpush1.msra.mxu0 %v526
        %1170 = vmatprep.subr.mxu0 0.0
        %1171 = vmatpush2.msra.mxu0 0.0
        %1172 = vmatprep.subr.mxu0 0.0
        %1173 = vmatpush2.msra.mxu0 0.0
        %1174 = vmatprep.subr.mxu0 0.0
        %1175 = vmatpush2.msra.mxu0 0.0
        %1176 = vmatprep.subr.mxu0 0.0
        %1177 = vmatpush2.msra.mxu0 0.0
        %1178 = vmatprep.subr.mxu0 0.0
        %1179 = vmatpush2.msra.mxu0 0.0
        %1180 = vmatprep.subr.mxu0 0.0
        %1181 = vmatpush2.msra.mxu0 0.0
        %1182 = vmatprep.subr.mxu0 0.0
        %1183 = vmatpush2.msra.mxu0 0.0
        %1184 = vmatprep.subr.mxu0 0.0
        %1185 = vmatpush2.msra.mxu0 0.0
        %1186 = vmatprep.subr.mxu0 0.0
        %1187 = vmatpush2.msra.mxu0 0.0
        %1188 = vmatprep.subr.mxu0 0.0
        %1189 = vmatpush2.msra.mxu0 0.0
        %1190 = vmatprep.subr.mxu0 0.0
        %1191 = vmatpush2.msra.mxu0 0.0
        %1192 = vmatprep.subr.mxu0 0.0
        %1193 = vmatpush2.msra.mxu0 0.0
        %1194 = vmatprep.subr.mxu0 0.0
        %1195 = vmatpush2.msra.mxu0 0.0
        %1196 = vmatprep.subr.mxu0 0.0
        %1197 = vmatpush2.msra.mxu0 0.0
        %1198 = vmatprep.subr.mxu0 0.0
        %1199 = vmatpush2.msra.mxu0 0.0
        %1200 = vmatprep.subr.mxu0 0.0
        %1201 = vmatpush2.msra.mxu0 0.0
        %1202 = vmatprep.mubr.f32.mxu0 0.0
        %1203 = vmatmul.mubr.f32.gmra.mxu0 %v1136
        %v1204 = vpop.f32.mrf.mxu0
        %v1205 = vadd.f32 0.0, %v1204
        %v1206 = vpop.f32.mrf.mxu0
        %1207 = vdwg.mxu0
        %v1209 = vsel %vm636, %v1002, 0
        %1211 = vmatprep.subr.mxu0 0.0
        %1212 = vmatpush1.msra.mxu0 0.0
        %1213 = vmatprep.subr.mxu0 0.0
        %1214 = vmatpush1.msra.mxu0 0.0
        %1215 = vmatprep.subr.mxu0 0.0
        %1216 = vmatpush1.msra.mxu0 0.0
        %1217 = vmatprep.subr.mxu0 0.0
        %1218 = vmatpush1.msra.mxu0 0.0
        %1219 = vmatprep.subr.mxu0 0.0
        %1220 = vmatpush1.msra.mxu0 0.0
        %1221 = vmatprep.subr.mxu0 0.0
        %1222 = vmatpush1.msra.mxu0 0.0
        %1223 = vmatprep.subr.mxu0 0.0
        %1224 = vmatpush1.msra.mxu0 0.0
        %1225 = vmatprep.subr.mxu0 0.0
        %1226 = vmatpush1.msra.mxu0 0.0
        %1227 = vmatprep.subr.mxu0 0.0
        %1228 = vmatpush1.msra.mxu0 0.0
        %1229 = vmatprep.subr.mxu0 0.0
        %1230 = vmatpush1.msra.mxu0 0.0
        %1231 = vmatprep.subr.mxu0 0.0
        %1232 = vmatpush1.msra.mxu0 0.0
        %1233 = vmatprep.subr.mxu0 0.0
        %1234 = vmatpush1.msra.mxu0 0.0
        %1235 = vmatprep.subr.mxu0 0.0
        %1236 = vmatpush1.msra.mxu0 0.0
        %1237 = vmatprep.subr.mxu0 0.0
        %1238 = vmatpush1.msra.mxu0 0.0
        %1239 = vmatprep.subr.mxu0 0.0
        %1240 = vmatpush1.msra.mxu0 0.0
        %1241 = vmatprep.subr.mxu0 0.0
        %1242 = vmatpush1.msra.mxu0 %v527
        %1243 = vmatprep.subr.mxu0 0.0
        %1244 = vmatpush2.msra.mxu0 0.0
        %1245 = vmatprep.subr.mxu0 0.0
        %1246 = vmatpush2.msra.mxu0 0.0
        %1247 = vmatprep.subr.mxu0 0.0
        %1248 = vmatpush2.msra.mxu0 0.0
        %1249 = vmatprep.subr.mxu0 0.0
        %1250 = vmatpush2.msra.mxu0 0.0
        %1251 = vmatprep.subr.mxu0 0.0
        %1252 = vmatpush2.msra.mxu0 0.0
        %1253 = vmatprep.subr.mxu0 0.0
        %1254 = vmatpush2.msra.mxu0 0.0
        %1255 = vmatprep.subr.mxu0 0.0
        %1256 = vmatpush2.msra.mxu0 0.0
        %1257 = vmatprep.subr.mxu0 0.0
        %1258 = vmatpush2.msra.mxu0 0.0
        %1259 = vmatprep.subr.mxu0 0.0
        %1260 = vmatpush2.msra.mxu0 0.0
        %1261 = vmatprep.subr.mxu0 0.0
        %1262 = vmatpush2.msra.mxu0 0.0
        %1263 = vmatprep.subr.mxu0 0.0
        %1264 = vmatpush2.msra.mxu0 0.0
        %1265 = vmatprep.subr.mxu0 0.0
        %1266 = vmatpush2.msra.mxu0 0.0
        %1267 = vmatprep.subr.mxu0 0.0
        %1268 = vmatpush2.msra.mxu0 0.0
        %1269 = vmatprep.subr.mxu0 0.0
        %1270 = vmatpush2.msra.mxu0 0.0
        %1271 = vmatprep.subr.mxu0 0.0
        %1272 = vmatpush2.msra.mxu0 0.0
        %1273 = vmatprep.subr.mxu0 0.0
        %1274 = vmatpush2.msra.mxu0 0.0
        %1275 = vmatprep.mubr.f32.mxu0 0.0
        %1276 = vmatmul.mubr.f32.gmra.mxu0 %v1209
        %v1277 = vpop.f32.mrf.mxu0
        %v1278 = vadd.f32 0.0, %v1277
        %v1279 = vpop.f32.mrf.mxu0
        %1280 = vdwg.mxu0
        %v1282 = vsel %vm636, %v1004, 0
        %1284 = vmatprep.subr.mxu0 0.0
        %1285 = vmatpush1.msra.mxu0 0.0
        %1286 = vmatprep.subr.mxu0 0.0
        %1287 = vmatpush1.msra.mxu0 0.0
        %1288 = vmatprep.subr.mxu0 0.0
        %1289 = vmatpush1.msra.mxu0 0.0
        %1290 = vmatprep.subr.mxu0 0.0
        %1291 = vmatpush1.msra.mxu0 0.0
        %1292 = vmatprep.subr.mxu0 0.0
        %1293 = vmatpush1.msra.mxu0 0.0
        %1294 = vmatprep.subr.mxu0 0.0
        %1295 = vmatpush1.msra.mxu0 0.0
        %1296 = vmatprep.subr.mxu0 0.0
        %1297 = vmatpush1.msra.mxu0 0.0
        %1298 = vmatprep.subr.mxu0 0.0
        %1299 = vmatpush1.msra.mxu0 0.0
        %1300 = vmatprep.subr.mxu0 0.0
        %1301 = vmatpush1.msra.mxu0 0.0
        %1302 = vmatprep.subr.mxu0 0.0
        %1303 = vmatpush1.msra.mxu0 0.0
        %1304 = vmatprep.subr.mxu0 0.0
        %1305 = vmatpush1.msra.mxu0 0.0
        %1306 = vmatprep.subr.mxu0 0.0
        %1307 = vmatpush1.msra.mxu0 0.0
        %1308 = vmatprep.subr.mxu0 0.0
        %1309 = vmatpush1.msra.mxu0 0.0
        %1310 = vmatprep.subr.mxu0 0.0
        %1311 = vmatpush1.msra.mxu0 0.0
        %1312 = vmatprep.subr.mxu0 0.0
        %1313 = vmatpush1.msra.mxu0 0.0
        %1314 = vmatprep.subr.mxu0 0.0
        %1315 = vmatpush1.msra.mxu0 %v528
        %1316 = vmatprep.subr.mxu0 0.0
        %1317 = vmatpush2.msra.mxu0 0.0
        %1318 = vmatprep.subr.mxu0 0.0
        %1319 = vmatpush2.msra.mxu0 0.0
        %1320 = vmatprep.subr.mxu0 0.0
        %1321 = vmatpush2.msra.mxu0 0.0
        %1322 = vmatprep.subr.mxu0 0.0
        %1323 = vmatpush2.msra.mxu0 0.0
        %1324 = vmatprep.subr.mxu0 0.0
        %1325 = vmatpush2.msra.mxu0 0.0
        %1326 = vmatprep.subr.mxu0 0.0
        %1327 = vmatpush2.msra.mxu0 0.0
        %1328 = vmatprep.subr.mxu0 0.0
        %1329 = vmatpush2.msra.mxu0 0.0
        %1330 = vmatprep.subr.mxu0 0.0
        %1331 = vmatpush2.msra.mxu0 0.0
        %1332 = vmatprep.subr.mxu0 0.0
        %1333 = vmatpush2.msra.mxu0 0.0
        %1334 = vmatprep.subr.mxu0 0.0
        %1335 = vmatpush2.msra.mxu0 0.0
        %1336 = vmatprep.subr.mxu0 0.0
        %1337 = vmatpush2.msra.mxu0 0.0
        %1338 = vmatprep.subr.mxu0 0.0
        %1339 = vmatpush2.msra.mxu0 0.0
        %1340 = vmatprep.subr.mxu0 0.0
        %1341 = vmatpush2.msra.mxu0 0.0
        %1342 = vmatprep.subr.mxu0 0.0
        %1343 = vmatpush2.msra.mxu0 0.0
        %1344 = vmatprep.subr.mxu0 0.0
        %1345 = vmatpush2.msra.mxu0 0.0
        %1346 = vmatprep.subr.mxu0 0.0
        %1347 = vmatpush2.msra.mxu0 0.0
        %1348 = vmatprep.mubr.f32.mxu0 0.0
        %1349 = vmatmul.mubr.f32.gmra.mxu0 %v1282
        %v1350 = vpop.f32.mrf.mxu0
        %v1351 = vadd.f32 0.0, %v1350
        %v1352 = vpop.f32.mrf.mxu0
        %1353 = vdwg.mxu0
        %v1354 = vadd.f32 %v1058, %v1132
        %v1355 = vadd.f32 %v1059, %v1205
        %v1356 = vadd.f32 %v1060, %v1278
        %v1357 = vadd.f32 %v1061, %v1351
        %1358 = vst.msk [vmem:[#allocation4] sm:$0xff] %vm636, %v1354
        %1359 = vst.msk [vmem:[#allocation4 + $0x8] sm:$0xff] %vm636, %v1355
        %1360 = vst.msk [vmem:[#allocation4 + $0x10] sm:$0xff] %vm636, %v1356
        %1361 = vst.msk [vmem:[#allocation4 + $0x18] sm:$0xff] %vm636, %v1357
        %1362 = vst.msk [vmem:[#allocation2] sm:$0xff] %vm1029, %v957
        %1363 = vst.msk [vmem:[#allocation2 + $0x8] sm:$0xff] %vm1029, %v958
        %1364 = vst.msk [vmem:[#allocation2 + $0x10] sm:$0xff] %vm1029, %v959
        %1365 = vst.msk [vmem:[#allocation2 + $0x18] sm:$0xff] %vm1029, %v960
        %p1366 = scmp.eq.s32.totalorder %s25, 1
        // Predicated region
        $region159: #{tpu_custom_call.1} parent=141 // pred_check
          %p1367 = pneg %p1366
        $region160: #{tpu_custom_call.1} parent=141 // pred_check_branch
          %1369 = sbr.rel (%p1367) target = $region162
        $region161: #{tpu_custom_call.1} parent=141 // pred_region
          %v1370 = vld [vmem:[#allocation4] sm:$0xff]
          %v1371 = vld [vmem:[#allocation4 + $0x8] sm:$0xff]
          %v1372 = vld [vmem:[#allocation4 + $0x10] sm:$0xff]
          %v1373 = vld [vmem:[#allocation4 + $0x18] sm:$0xff]
          %v1374 = vld [vmem:[#allocation3] sm:$0xff]
          %v1375 = vld [vmem:[#allocation3 + $0x8] sm:$0xff]
          %v1376 = vld [vmem:[#allocation3 + $0x10] sm:$0xff]
          %v1377 = vld [vmem:[#allocation3 + $0x18] sm:$0xff]
          %1379 = vset.pattern.permute.xlu0 0
          %1380 = vperm.xlu0 %1379, %v1374
          %v1381 = vpop.permute.xlu0 %1380
          %1384 = vset.pattern.permute.xlu0 0
          %1385 = vperm.xlu0 %1384, %v1375
          %v1386 = vpop.permute.xlu0 %1385
          %1389 = vset.pattern.permute.xlu0 0
          %1390 = vperm.xlu0 %1389, %v1376
          %v1391 = vpop.permute.xlu0 %1390
          %1394 = vset.pattern.permute.xlu0 0
          %1395 = vperm.xlu0 %1394, %v1377
          %v1396 = vpop.permute.xlu0 %1395
          %v1398 = vrcp.pop %v1381
          %v1399 = vmul.f32 %v1370, %v1398
          %v1400 = vrcp.pop %v1386
          %v1401 = vmul.f32 %v1371, %v1400
          %v1402 = vrcp.pop %v1391
          %v1403 = vmul.f32 %v1372, %v1402
          %v1404 = vrcp.pop %v1396
          %v1405 = vmul.f32 %v1373, %v1404
          %1406 = vst.msk [vmem:[%s484] sm:$0xff] %vm636, %v1399
          %1407 = vst.msk [vmem:[%s484 + $0x8] sm:$0xff] %vm636, %v1401
          %1408 = vst.msk [vmem:[%s484 + $0x10] sm:$0xff] %vm636, %v1403
          %1409 = vst.msk [vmem:[%s484 + $0x18] sm:$0xff] %vm636, %v1405
        $region162: #{tpu_custom_call.1} parent=141 // pred_fallthru
          _
        %s1410 = sand.u32 %s196, 1
        %s1411 = sand.u32 %s196, 1
        %s1412 = smul.addr %s1411, 32
        %s1413 = scalar_lea.vmem [#allocation8], %s1412
        // Predicated region
        $region163: #{tpu_custom_call.1} parent=141 // pred_check
          %p1414 = pneg %p206
        $region164: #{tpu_custom_call.1} parent=141 // pred_check_branch
          %1416 = sbr.rel (%p1414) target = $region166
        $region165: #{tpu_custom_call.1} parent=141 // pred_region
          %s1417 = smul.u32 4, %s23
          %s1418 = smul.addr %s1417, 2
          %s1419 = sadd.s32 %s24, %s1418
          %s1420 = smul.addr %s22, 8
          %s1421 = sadd.s32 %s1419, %s1420
          %s1422 = smul.addr %s1421, 8
          %s1423 = scalar_lea.vmem %s5, %s1422
          // Predicated region
          $region167: #{tpu_custom_call.1} parent=165 // pred_check
            _
          $region168: #{tpu_custom_call.1} parent=165 // pred_check_branch
            %1425 = sbr.rel (0) target = $region170
          $region169: #{tpu_custom_call.1} parent=165 // pred_region
            // Predicated region
            $region171: #{tpu_custom_call.1} parent=169 // pred_check
              _
            $region172: #{tpu_custom_call.1} parent=169 // pred_check_branch
              %1427 = sbr.rel (0) target = $region174
            $region173: #{tpu_custom_call.1} parent=169 // pred_region
              // Predicated region
              $region186: #{tpu_custom_call.1} parent=173 // pred_check
                _
              $region187: #{tpu_custom_call.1} parent=173 // pred_check_branch
                %1449 = sbr.rel (0) target = $region189
              $region188: #{tpu_custom_call.1} parent=173 // pred_region
                loop: start=0, step=1, limit=1
                $region190: #{tpu_custom_call.1} parent=188 // loop_pre_header
                  _
                $region191: #{tpu_custom_call.1} parent=188 // loop_header
                  %s1451 = sphi 0, %s1455
                  %p1452 = scmp.ge.s32.totalorder %s1451, 1
                  %s1456 = sphi %s1413, %s1413
                  %s1457 = sphi %s1423, %s1423
                $region192: #{tpu_custom_call.1} parent=188 // loop_header_branch
                  %1454 = sbr.rel (%p1452) target = $region196
                $region193: #{tpu_custom_call.1} parent=188 // loop_body
                  %v1458 = vld [vmem:[%s1456] sm:$0xff]
                  %1459 = vst [vmem:[%s1457] sm:$0xff] %v1458
                  %v1460 = vld [vmem:[%s1456 + $0x8] sm:$0xff]
                  %1461 = vst [vmem:[%s1457 + $0x10] sm:$0xff] %v1460
                  %v1462 = vld [vmem:[%s1456 + $0x10] sm:$0xff]
                  %1463 = vst [vmem:[%s1457 + $0x20] sm:$0xff] %v1462
                  %v1464 = vld [vmem:[%s1456 + $0x18] sm:$0xff]
                  %1465 = vst [vmem:[%s1457 + $0x30] sm:$0xff] %v1464
                $region194: #{tpu_custom_call.1} parent=188 // loop_footer
                  %s1455 = sadd.s32 1, %s1451
                $region195: #{tpu_custom_call.1} parent=188 // loop_footer_branch
                  %1450 = sbr.rel target = $region191
                $region196: #{tpu_custom_call.1} parent=188 // loop_exit
                  _
              $region189: #{tpu_custom_call.1} parent=173 // pred_fallthru
                _
              // Predicated region
              $region197: #{tpu_custom_call.1} parent=173 // pred_check
                _
              $region198: #{tpu_custom_call.1} parent=173 // pred_check_branch
                %1467 = sbr.rel target = $region200
              $region199: #{tpu_custom_call.1} parent=173 // pred_region
                _
              $region200: #{tpu_custom_call.1} parent=173 // pred_fallthru
                _
            $region174: #{tpu_custom_call.1} parent=169 // pred_fallthru
              _
            // Predicated region
            $region175: #{tpu_custom_call.1} parent=169 // pred_check
              _
            $region176: #{tpu_custom_call.1} parent=169 // pred_check_branch
              %1429 = sbr.rel target = $region178
            $region177: #{tpu_custom_call.1} parent=169 // pred_region
              %s1431 = ssub.s32 256, 1
              loop: start=0, step=1, limit=1
              $region179: #{tpu_custom_call.1} parent=177 // loop_pre_header
                _
              $region180: #{tpu_custom_call.1} parent=177 // loop_header
                %s1433 = sphi 0, %s1437
                %p1434 = scmp.ge.s32.totalorder %s1433, 1
                %s1438 = sphi %s1413, %s1413
                %s1439 = sphi %s1423, %s1423
              $region181: #{tpu_custom_call.1} parent=177 // loop_header_branch
                %1436 = sbr.rel (%p1434) target = $region185
              $region182: #{tpu_custom_call.1} parent=177 // loop_body
                %v1440 = vld [vmem:[%s1438] sm:%s1431]
                %1441 = vst [vmem:[%s1439] sm:%s1431] %v1440
                %v1442 = vld [vmem:[%s1438 + $0x8] sm:%s1431]
                %1443 = vst [vmem:[%s1439 + $0x10] sm:%s1431] %v1442
                %v1444 = vld [vmem:[%s1438 + $0x10] sm:%s1431]
                %1445 = vst [vmem:[%s1439 + $0x20] sm:%s1431] %v1444
                %v1446 = vld [vmem:[%s1438 + $0x18] sm:%s1431]
                %1447 = vst [vmem:[%s1439 + $0x30] sm:%s1431] %v1446
              $region183: #{tpu_custom_call.1} parent=177 // loop_footer
                %s1437 = sadd.s32 1, %s1433
              $region184: #{tpu_custom_call.1} parent=177 // loop_footer_branch
                %1432 = sbr.rel target = $region180
              $region185: #{tpu_custom_call.1} parent=177 // loop_exit
                _
            $region178: #{tpu_custom_call.1} parent=169 // pred_fallthru
              _
          $region170: #{tpu_custom_call.1} parent=165 // pred_fallthru
            _
          %1468 = vnop
        $region166: #{tpu_custom_call.1} parent=141 // pred_fallthru
          _
      $region142: #{tpu_custom_call.1} parent=5 // pred_fallthru
        _
      %p1469 = scmp.le.s32.totalorder 2, %s11
      // Predicated region
      $region201: #{tpu_custom_call.1} parent=5 // pred_check
        %p1470 = pneg %p1469
      $region202: #{tpu_custom_call.1} parent=5 // pred_check_branch
        %1472 = sbr.rel (%p1470) target = $region204
      $region203: #{tpu_custom_call.1} parent=5 // pred_region
        %s1473 = ssub.s32 %s11, 2
        // Predicated region
        $region205: #{tpu_custom_call.1} parent=203 // pred_check
          %p1474 = pneg %p212
        $region206: #{tpu_custom_call.1} parent=203 // pred_check_branch
          %1476 = sbr.rel (%p1474) target = $region208
        $region207: #{tpu_custom_call.1} parent=203 // pred_region
          %s1477 = sand.u32 %s197, 1
          %s1478 = sand.u32 %s197, 1
          %s1479 = smul.addr %s1478, 32
          %s1480 = scalar_lea.vmem [#allocation8], %s1479
        $region208: #{tpu_custom_call.1} parent=203 // pred_fallthru
          _
      $region204: #{tpu_custom_call.1} parent=5 // pred_fallthru
        _
    $region6: #{tpu_custom_call.1} parent=1 // loop_footer
      %s15 = sadd.s32 1, %s11
    $region7: #{tpu_custom_call.1} parent=1 // loop_footer_branch
      %10 = sbr.rel target = $region3
    $region8: #{tpu_custom_call.1} parent=1 // loop_exit
      _

</llo_original>
